<compile_context>
chip_gen: v7x
topology: tpu7x:2x2x1
jax: 0.10.0
libtpu: 0.0.40
codegen_flags: <defaults>
</compile_context>

<pallas_src>
import math

import jax
import jax.numpy as jnp
from jax import lax
from jax.experimental import pallas as pl
from jax.experimental.pallas import tpu as pltpu

_NEG_FILL = -1e30  # large finite negative: avoids NaN for fully-masked rows


def _pick_seq_block(seq_len: int, cap: int, floor: int) -> int:
    """Largest power-of-two block in [floor, cap] dividing seq_len, else seq_len."""
    b = cap
    while b >= floor:
        if seq_len % b == 0:
            return b
        b //= 2
    return seq_len


def _pick_head_group(num_heads: int, d_v: int) -> int:
    """Heads per grid step: aim for a lane-dense (>=128-wide) output tile."""
    cap = max(1, min(num_heads, 128 // max(d_v, 1), 8))
    for c in range(cap, 0, -1):
        if num_heads % c == 0:
            return c
    return 1


def _make_attention_kernel(scale: float, has_mask: bool):
    def kernel(*refs):
        if has_mask:
            q_ref, k_ref, v_ref, mask_ref, o_ref, m_sc, l_sc, acc_sc = refs
        else:
            q_ref, k_ref, v_ref, o_ref, m_sc, l_sc, acc_sc = refs
            mask_ref = None

        kv_idx = pl.program_id(3)

        @pl.when(kv_idx == 0)
        def _init():
            m_sc[...] = jnp.full_like(m_sc, -jnp.inf)
            l_sc[...] = jnp.zeros_like(l_sc)
            acc_sc[...] = jnp.zeros_like(acc_sc)

        # Native-dtype MXU inputs; fold 1/sqrt(d_k) into the (small) Q tile.
        q = q_ref[0] * scale              # (Hb, tq, d_k)
        k = k_ref[0]                      # (Hb, tkv, d_k)
        v = v_ref[0]                      # (Hb, tkv, d_v)

        # scores = Q @ K^T, batched over heads, contracting the shared last
        # dim directly (no explicit transpose of K).
        s = lax.dot_general(
            q, k,
            dimension_numbers=(((2,), (2,)), ((0,), (0,))),
            preferred_element_type=jnp.float32)   # (Hb, tq, tkv) f32

        if has_mask:
            msk = mask_ref[0]             # (1 or Hb, tq, tkv) int8
            s = jnp.where(msk != 0, s, jnp.float32(_NEG_FILL))

        # Online softmax (statistics kept in f32).
        m_prev = m_sc[...]
        m_new = jnp.maximum(m_prev, jnp.max(s, axis=-1, keepdims=True))
        alpha = jnp.exp(m_prev - m_new)
        p = jnp.exp(s - m_new)

        l_sc[...] = alpha * l_sc[...] + jnp.sum(p, axis=-1, keepdims=True)

        pv = lax.dot_general(
            p.astype(v.dtype), v,
            dimension_numbers=(((2,), (1,)), ((0,), (0,))),
            preferred_element_type=jnp.float32)   # (Hb, tq, d_v) f32
        acc_sc[...] = alpha * acc_sc[...] + pv
        m_sc[...] = m_new

        @pl.when(kv_idx == pl.num_programs(3) - 1)
        def _finalize():
            # EUP reciprocal + one Newton step keeps full f32 accuracy.
            l = l_sc[...]
            inv = pl.reciprocal(l, approx=True)
            inv = inv * (2.0 - l * inv)
            out = acc_sc[...] * inv                 # (Hb, tq, d_v) f32
            hb, _, d_v = out.shape
            # Pack heads along lanes -> one lane-dense (tq, Hb*d_v) HBM tile.
            for hh in range(hb):
                o_ref[0, 0, :, hh * d_v:(hh + 1) * d_v] = out[hh].astype(o_ref.dtype)

    return kernel


def self_attention(Q, K, V, mask=None):
    """Scaled dot-product attention matching the PyTorch SelfAttention module.

    Q, K: (B, h, L, d_k); V: (B, h, L, d_v);
    mask: None, (L, L), (1, 1, L, L) or (B, h, L, L) with 0 = masked.
    Returns: (B, h, L, d_v).
    """
    B, h, L, d_k = Q.shape
    d_v = V.shape[-1]
    assert K.shape == (B, h, L, d_k), "K must match Q in (B, h, L, d_k)"
    assert V.shape == (B, h, L, d_v), "V must be (B, h, L, d_v)"

    scale = 1.0 / math.sqrt(d_k)

    hb = _pick_head_group(h, d_v)       # heads per grid step
    g = h // hb                         # head groups
    tq = _pick_seq_block(L, 256, 8)     # query tile
    tkv = _pick_seq_block(L, 512, 128)  # kv tile (last dim of mask block)

    grid = (B, g, L // tq, L // tkv)

    in_specs = [
        pl.BlockSpec((1, hb, tq, d_k), lambda b, gi, qi, ki: (b, gi, qi, 0)),
        pl.BlockSpec((1, hb, tkv, d_k), lambda b, gi, qi, ki: (b, gi, ki, 0)),
        pl.BlockSpec((1, hb, tkv, d_v), lambda b, gi, qi, ki: (b, gi, ki, 0)),
    ]
    args = [Q, K, V]

    has_mask = mask is not None
    if has_mask:
        mask = jnp.asarray(mask)
        if mask.ndim == 2:
            mask = mask[None, None]
        shared = mask.shape[0] == 1 and mask.shape[1] == 1
        if not shared:
            mask = jnp.broadcast_to(mask, (B, h, L, L))
        mask_i8 = (mask != 0).astype(jnp.int8)   # 4x less HBM traffic than f32
        if shared:
            # Single (L, L) tile reused for every (batch, head-group).
            in_specs.append(
                pl.BlockSpec((1, 1, tq, tkv), lambda b, gi, qi, ki: (0, 0, qi, ki)))
        else:
            in_specs.append(
                pl.BlockSpec((1, hb, tq, tkv), lambda b, gi, qi, ki: (b, gi, qi, ki)))
        args.append(mask_i8)

    out_specs = pl.BlockSpec((1, 1, tq, hb * d_v),
                             lambda b, gi, qi, ki: (b, gi, qi, 0))

    kernel = _make_attention_kernel(scale, has_mask)

    out = pl.pallas_call(
        kernel,
        out_shape=jax.ShapeDtypeStruct((B, g, L, hb * d_v), Q.dtype),
        grid_spec=pltpu.PrefetchScalarGridSpec(
            num_scalar_prefetch=0,
            grid=grid,
            in_specs=in_specs,
            out_specs=out_specs,
            scratch_shapes=[
                pltpu.VMEM((hb, tq, 1), jnp.float32),    # running max
                pltpu.VMEM((hb, tq, 1), jnp.float32),    # running denom
                pltpu.VMEM((hb, tq, d_v), jnp.float32),  # output accumulator
            ]),
        compiler_params=pltpu.CompilerParams(
            dimension_semantics=("parallel", "parallel", "parallel", "arbitrary"),
            vmem_limit_bytes=32 * 1024 * 1024,
        ),
    )(*args)

    # (B, g, L, hb*d_v) -> (B, h, L, d_v): wrapper-side layout plumbing only.
    out = out.reshape(B, g, L, hb, d_v).transpose(0, 1, 3, 2, 4)
    return out.reshape(B, h, L, d_v)


def _reference(Q, K, V, mask=None):
    d_k = Q.shape[-1]
    scores = jnp.einsum("bhld,bhmd->bhlm", Q, K) / math.sqrt(d_k)
    if mask is not None:
        mask = jnp.broadcast_to(jnp.asarray(mask), scores.shape)
        scores = jnp.where(mask == 0, -jnp.inf, scores)
    attn = jax.nn.softmax(scores, axis=-1)
    return jnp.einsum("bhlm,bhmd->bhld", attn, V)


if __name__ == "__main__":
    # Small shapes consistent with the module: B=2, h=4, L=8, d_k=d_v=32.
    B, h, L, d_k, d_v = 2, 4, 8, 32, 32
    key = jax.random.PRNGKey(0)
    kq, kk, kv = jax.random.split(key, 3)
    Q = jax.random.normal(kq, (B, h, L, d_k), dtype=jnp.float32)
    K = jax.random.normal(kk, (B, h, L, d_k), dtype=jnp.float32)
    V = jax.random.normal(kv, (B, h, L, d_v), dtype=jnp.float32)

    causal = jnp.tril(jnp.ones((L, L), dtype=jnp.float32))

    # Full (B, h, L, L) mask, as in the module's docstring.
    full_mask = jnp.broadcast_to(causal, (B, h, L, L))
    out = self_attention(Q, K, V, full_mask)
    jax.block_until_ready(out)
    ref = _reference(Q, K, V, full_mask)
    assert out.shape == (B, h, L, d_v)
    assert jnp.allclose(out, ref, atol=1e-4, rtol=1e-4)

    # Shared (L, L) mask path: a single int8 tile reused for every (b, h).
    out_shared = self_attention(Q, K, V, causal)
    jax.block_until_ready(out_shared)
    assert jnp.allclose(out_shared, ref, atol=1e-4, rtol=1e-4)

    # No-mask path: no mask tensor is built or streamed at all.
    out_nomask = self_attention(Q, K, V, None)
    jax.block_until_ready(out_nomask)
    ref_nomask = _reference(Q, K, V, None)
    assert jnp.allclose(out_nomask, ref_nomask, atol=1e-4, rtol=1e-4)

    print("KERNEL_OK")
</pallas_src>

<mosaic_0001>
module attributes {stable_mosaic.version = 11 : i64} {
  func.func @kernel(%arg0: i32, %arg1: i32, %arg2: i32, %arg3: i32, %arg4: memref<1x4x8x32xf32, #tpu.memory_space<vmem>>, %arg5: memref<1x4x8x32xf32, #tpu.memory_space<vmem>>, %arg6: memref<1x4x8x32xf32, #tpu.memory_space<vmem>>, %arg7: memref<1x4x8x8xi8, #tpu.memory_space<vmem>>, %arg8: memref<1x1x8x128xf32, #tpu.memory_space<vmem>>, %arg9: memref<4x8x1xf32, #tpu.memory_space<vmem>>, %arg10: memref<4x8x1xf32, #tpu.memory_space<vmem>>, %arg11: memref<4x8x32xf32, #tpu.memory_space<vmem>>) attributes {dimension_semantics = [#tpu.dimension_semantics<parallel>, #tpu.dimension_semantics<parallel>, #tpu.dimension_semantics<parallel>, #tpu.dimension_semantics<arbitrary>], iteration_bounds = array<i64: 2, 1, 1, 1>, scalar_prefetch = 0 : i64, scratch_operands = 3 : i64, tpu.core_type = #tpu.core_type<tc>, window_params = [{transform_indices = @transform_0, window_bounds = array<i64: 1, 4, 8, 32>}, {transform_indices = @transform_1, window_bounds = array<i64: 1, 4, 8, 32>}, {transform_indices = @transform_2, window_bounds = array<i64: 1, 4, 8, 32>}, {transform_indices = @transform_3, window_bounds = array<i64: 1, 4, 8, 8>}, {transform_indices = @transform_4, window_bounds = array<i64: 1, 1, 8, 128>}]} {
    %c0_i32 = arith.constant 0 : i32
    %0 = arith.cmpi eq, %arg3, %c0_i32 : i32
    %1 = arith.extui %0 : i1 to i32
    %c0_i32_0 = arith.constant 0 : i32
    %2 = arith.cmpi ne, %1, %c0_i32_0 : i32
    scf.if %2 {
      %cst_41 = arith.constant 0xFF800000 : f32
      %43 = vector.broadcast %cst_41 : f32 to vector<4x8x1xf32>
      %c0_42 = arith.constant 0 : index
      %c0_43 = arith.constant 0 : index
      %c0_44 = arith.constant 0 : index
      %44 = vector.load %arg9[%c0_42, %c0_43, %c0_44] : memref<4x8x1xf32, #tpu.memory_space<vmem>>, vector<4x8x1xf32>
      tpu.vector_store %arg9[%c0_42, %c0_43, %c0_44], %43 {strides = array<i32>} : memref<4x8x1xf32, #tpu.memory_space<vmem>>, vector<4x8x1xf32>,
      %cst_45 = arith.constant 0.000000e+00 : f32
      %45 = vector.broadcast %cst_45 : f32 to vector<4x8x1xf32>
      %c0_46 = arith.constant 0 : index
      %c0_47 = arith.constant 0 : index
      %c0_48 = arith.constant 0 : index
      %46 = vector.load %arg10[%c0_46, %c0_47, %c0_48] : memref<4x8x1xf32, #tpu.memory_space<vmem>>, vector<4x8x1xf32>
      tpu.vector_store %arg10[%c0_46, %c0_47, %c0_48], %45 {strides = array<i32>} : memref<4x8x1xf32, #tpu.memory_space<vmem>>, vector<4x8x1xf32>,
      %cst_49 = arith.constant 0.000000e+00 : f32
      %47 = vector.broadcast %cst_49 : f32 to vector<4x8x32xf32>
      %c0_50 = arith.constant 0 : index
      %c0_51 = arith.constant 0 : index
      %c0_52 = arith.constant 0 : index
      %48 = vector.load %arg11[%c0_50, %c0_51, %c0_52] : memref<4x8x32xf32, #tpu.memory_space<vmem>>, vector<4x8x32xf32>
      tpu.vector_store %arg11[%c0_50, %c0_51, %c0_52], %47 {strides = array<i32>} : memref<4x8x32xf32, #tpu.memory_space<vmem>>, vector<4x8x32xf32>,
    } else {
    }
    %c0 = arith.constant 0 : index
    %c0_1 = arith.constant 0 : index
    %c0_2 = arith.constant 0 : index
    %c0_3 = arith.constant 0 : index
    %3 = vector.load %arg4[%c0, %c0_1, %c0_2, %c0_3] : memref<1x4x8x32xf32, #tpu.memory_space<vmem>>, vector<1x4x8x32xf32>
    %4 = vector.shape_cast %3 : vector<1x4x8x32xf32> to vector<4x8x32xf32>
    %cst = arith.constant 0.176776692 : f32
    %5 = vector.broadcast %cst : f32 to vector<4x8x32xf32>
    %6 = arith.mulf %4, %5 : vector<4x8x32xf32>
    %c0_4 = arith.constant 0 : index
    %c0_5 = arith.constant 0 : index
    %c0_6 = arith.constant 0 : index
    %c0_7 = arith.constant 0 : index
    %7 = vector.load %arg5[%c0_4, %c0_5, %c0_6, %c0_7] : memref<1x4x8x32xf32, #tpu.memory_space<vmem>>, vector<1x4x8x32xf32>
    %8 = vector.shape_cast %7 : vector<1x4x8x32xf32> to vector<4x8x32xf32>
    %c0_8 = arith.constant 0 : index
    %c0_9 = arith.constant 0 : index
    %c0_10 = arith.constant 0 : index
    %c0_11 = arith.constant 0 : index
    %9 = vector.load %arg6[%c0_8, %c0_9, %c0_10, %c0_11] : memref<1x4x8x32xf32, #tpu.memory_space<vmem>>, vector<1x4x8x32xf32>
    %10 = vector.shape_cast %9 : vector<1x4x8x32xf32> to vector<4x8x32xf32>
    %cst_12 = arith.constant dense<0.000000e+00> : vector<4x8x8xf32>
    %11 = tpu.matmul %6, %8, %cst_12 {dimension_numbers = #tpu.dot_dimension_numbers<[2], [2], [1], [1], [0, 0, 0, 1, 1, 1], [0], [0]>} : vector<4x8x32xf32>, vector<4x8x32xf32>, vector<4x8x8xf32> -> vector<4x8x8xf32>
    %c0_13 = arith.constant 0 : index
    %c0_14 = arith.constant 0 : index
    %c0_15 = arith.constant 0 : index
    %c0_16 = arith.constant 0 : index
    %12 = vector.load %arg7[%c0_13, %c0_14, %c0_15, %c0_16] : memref<1x4x8x8xi8, #tpu.memory_space<vmem>>, vector<1x4x8x8xi8>
    %13 = vector.shape_cast %12 : vector<1x4x8x8xi8> to vector<4x8x8xi8>
    %c0_i8 = arith.constant 0 : i8
    %14 = vector.broadcast %c0_i8 : i8 to vector<4x8x8xi8>
    %15 = arith.cmpi ne, %13, %14 : vector<4x8x8xi8>
    %cst_17 = arith.constant -1.000000e+30 : f32
    %16 = vector.broadcast %cst_17 : f32 to vector<4x8x8xf32>
    %17 = arith.select %15, %11, %16 : vector<4x8x8xi1>, vector<4x8x8xf32>
    %c0_18 = arith.constant 0 : index
    %c0_19 = arith.constant 0 : index
    %c0_20 = arith.constant 0 : index
    %18 = vector.load %arg9[%c0_18, %c0_19, %c0_20] : memref<4x8x1xf32, #tpu.memory_space<vmem>>, vector<4x8x1xf32>
    %cst_21 = arith.constant dense<0xFF800000> : vector<4x8xf32>
    %19 = vector.multi_reduction <maximumf>, %17, %cst_21 [2] : vector<4x8x8xf32> to vector<4x8xf32>
    %20 = vector.shape_cast %19 : vector<4x8xf32> to vector<4x8x1xf32>
    %21 = arith.maximumf %18, %20 : vector<4x8x1xf32>
    %22 = arith.subf %18, %21 : vector<4x8x1xf32>
    %23 = math.exp %22 : vector<4x8x1xf32>
    %24 = vector.broadcast %21 : vector<4x8x1xf32> to vector<4x8x8xf32>
    %25 = arith.subf %17, %24 : vector<4x8x8xf32>
    %26 = math.exp %25 : vector<4x8x8xf32>
    %c0_22 = arith.constant 0 : index
    %c0_23 = arith.constant 0 : index
    %c0_24 = arith.constant 0 : index
    %27 = vector.load %arg10[%c0_22, %c0_23, %c0_24] : memref<4x8x1xf32, #tpu.memory_space<vmem>>, vector<4x8x1xf32>
    %28 = arith.mulf %23, %27 : vector<4x8x1xf32>
    %cst_25 = arith.constant dense<0.000000e+00> : vector<4x8xf32>
    %29 = vector.multi_reduction <add>, %26, %cst_25 [2] : vector<4x8x8xf32> to vector<4x8xf32>
    %30 = vector.shape_cast %29 : vector<4x8xf32> to vector<4x8x1xf32>
    %31 = arith.addf %28, %30 : vector<4x8x1xf32>
    %c0_26 = arith.constant 0 : index
    %c0_27 = arith.constant 0 : index
    %c0_28 = arith.constant 0 : index
    %32 = vector.load %arg10[%c0_26, %c0_27, %c0_28] : memref<4x8x1xf32, #tpu.memory_space<vmem>>, vector<4x8x1xf32>
    tpu.vector_store %arg10[%c0_26, %c0_27, %c0_28], %31 {strides = array<i32>} : memref<4x8x1xf32, #tpu.memory_space<vmem>>, vector<4x8x1xf32>,
    %cst_29 = arith.constant dense<0.000000e+00> : vector<4x8x32xf32>
    %33 = tpu.matmul %26, %10, %cst_29 {dimension_numbers = #tpu.dot_dimension_numbers<[2], [1], [1], [2], [0, 0, 0, 1, 1, 2], [0], [0]>} : vector<4x8x8xf32>, vector<4x8x32xf32>, vector<4x8x32xf32> -> vector<4x8x32xf32>
    %c0_30 = arith.constant 0 : index
    %c0_31 = arith.constant 0 : index
    %c0_32 = arith.constant 0 : index
    %34 = vector.load %arg11[%c0_30, %c0_31, %c0_32] : memref<4x8x32xf32, #tpu.memory_space<vmem>>, vector<4x8x32xf32>
    %35 = vector.broadcast %23 : vector<4x8x1xf32> to vector<4x8x32xf32>
    %36 = arith.mulf %35, %34 : vector<4x8x32xf32>
    %37 = arith.addf %36, %33 : vector<4x8x32xf32>
    %c0_33 = arith.constant 0 : index
    %c0_34 = arith.constant 0 : index
    %c0_35 = arith.constant 0 : index
    %38 = vector.load %arg11[%c0_33, %c0_34, %c0_35] : memref<4x8x32xf32, #tpu.memory_space<vmem>>, vector<4x8x32xf32>
    tpu.vector_store %arg11[%c0_33, %c0_34, %c0_35], %37 {strides = array<i32>} : memref<4x8x32xf32, #tpu.memory_space<vmem>>, vector<4x8x32xf32>,
    %c0_36 = arith.constant 0 : index
    %c0_37 = arith.constant 0 : index
    %c0_38 = arith.constant 0 : index
    %39 = vector.load %arg9[%c0_36, %c0_37, %c0_38] : memref<4x8x1xf32, #tpu.memory_space<vmem>>, vector<4x8x1xf32>
    tpu.vector_store %arg9[%c0_36, %c0_37, %c0_38], %21 {strides = array<i32>} : memref<4x8x1xf32, #tpu.memory_space<vmem>>, vector<4x8x1xf32>,
    %c0_i32_39 = arith.constant 0 : i32
    %40 = arith.cmpi eq, %arg3, %c0_i32_39 : i32
    %41 = arith.extui %40 : i1 to i32
    %c0_i32_40 = arith.constant 0 : i32
    %42 = arith.cmpi ne, %41, %c0_i32_40 : i32
    scf.if %42 {
      %c0_41 = arith.constant 0 : index
      %c0_42 = arith.constant 0 : index
      %c0_43 = arith.constant 0 : index
      %43 = vector.load %arg10[%c0_41, %c0_42, %c0_43] : memref<4x8x1xf32, #tpu.memory_space<vmem>>, vector<4x8x1xf32>
      %44 = tpu.reciprocal %43 {approx = true} : vector<4x8x1xf32> -> vector<4x8x1xf32>
      %45 = arith.mulf %43, %44 : vector<4x8x1xf32>
      %cst_44 = arith.constant 2.000000e+00 : f32
      %46 = vector.broadcast %cst_44 : f32 to vector<4x8x1xf32>
      %47 = arith.subf %46, %45 : vector<4x8x1xf32>
      %48 = arith.mulf %44, %47 : vector<4x8x1xf32>
      %c0_45 = arith.constant 0 : index
      %c0_46 = arith.constant 0 : index
      %c0_47 = arith.constant 0 : index
      %49 = vector.load %arg11[%c0_45, %c0_46, %c0_47] : memref<4x8x32xf32, #tpu.memory_space<vmem>>, vector<4x8x32xf32>
      %50 = vector.broadcast %48 : vector<4x8x1xf32> to vector<4x8x32xf32>
      %51 = arith.mulf %49, %50 : vector<4x8x32xf32>
      %52 = vector.extract_strided_slice %51 {offsets = [0, 0, 0], sizes = [1, 8, 32], strides = [1, 1, 1]} : vector<4x8x32xf32> to vector<1x8x32xf32>
      %53 = vector.shape_cast %52 : vector<1x8x32xf32> to vector<8x32xf32>
      %c0_48 = arith.constant 0 : index
      %c0_49 = arith.constant 0 : index
      %c0_50 = arith.constant 0 : index
      %c0_51 = arith.constant 0 : index
      %54 = vector.load %arg8[%c0_48, %c0_49, %c0_50, %c0_51] : memref<1x1x8x128xf32, #tpu.memory_space<vmem>>, vector<1x1x8x32xf32>
      %55 = vector.shape_cast %54 : vector<1x1x8x32xf32> to vector<8x32xf32>
      %56 = vector.shape_cast %53 : vector<8x32xf32> to vector<1x1x8x32xf32>
      tpu.vector_store %arg8[%c0_48, %c0_49, %c0_50, %c0_51], %56 {strides = array<i32>} : memref<1x1x8x128xf32, #tpu.memory_space<vmem>>, vector<1x1x8x32xf32>,
      %57 = vector.extract_strided_slice %51 {offsets = [1, 0, 0], sizes = [1, 8, 32], strides = [1, 1, 1]} : vector<4x8x32xf32> to vector<1x8x32xf32>
      %58 = vector.shape_cast %57 : vector<1x8x32xf32> to vector<8x32xf32>
      %c0_52 = arith.constant 0 : index
      %c0_53 = arith.constant 0 : index
      %c0_54 = arith.constant 0 : index
      %c32 = arith.constant 32 : index
      %59 = vector.load %arg8[%c0_52, %c0_53, %c0_54, %c32] : memref<1x1x8x128xf32, #tpu.memory_space<vmem>>, vector<1x1x8x32xf32>
      %60 = vector.shape_cast %59 : vector<1x1x8x32xf32> to vector<8x32xf32>
      %61 = vector.shape_cast %58 : vector<8x32xf32> to vector<1x1x8x32xf32>
      tpu.vector_store %arg8[%c0_52, %c0_53, %c0_54, %c32], %61 {strides = array<i32>} : memref<1x1x8x128xf32, #tpu.memory_space<vmem>>, vector<1x1x8x32xf32>,
      %62 = vector.extract_strided_slice %51 {offsets = [2, 0, 0], sizes = [1, 8, 32], strides = [1, 1, 1]} : vector<4x8x32xf32> to vector<1x8x32xf32>
      %63 = vector.shape_cast %62 : vector<1x8x32xf32> to vector<8x32xf32>
      %c0_55 = arith.constant 0 : index
      %c0_56 = arith.constant 0 : index
      %c0_57 = arith.constant 0 : index
      %c64 = arith.constant 64 : index
      %64 = vector.load %arg8[%c0_55, %c0_56, %c0_57, %c64] : memref<1x1x8x128xf32, #tpu.memory_space<vmem>>, vector<1x1x8x32xf32>
      %65 = vector.shape_cast %64 : vector<1x1x8x32xf32> to vector<8x32xf32>
      %66 = vector.shape_cast %63 : vector<8x32xf32> to vector<1x1x8x32xf32>
      tpu.vector_store %arg8[%c0_55, %c0_56, %c0_57, %c64], %66 {strides = array<i32>} : memref<1x1x8x128xf32, #tpu.memory_space<vmem>>, vector<1x1x8x32xf32>,
      %67 = vector.extract_strided_slice %51 {offsets = [3, 0, 0], sizes = [1, 8, 32], strides = [1, 1, 1]} : vector<4x8x32xf32> to vector<1x8x32xf32>
      %68 = vector.shape_cast %67 : vector<1x8x32xf32> to vector<8x32xf32>
      %c0_58 = arith.constant 0 : index
      %c0_59 = arith.constant 0 : index
      %c0_60 = arith.constant 0 : index
      %c96 = arith.constant 96 : index
      %69 = vector.load %arg8[%c0_58, %c0_59, %c0_60, %c96] : memref<1x1x8x128xf32, #tpu.memory_space<vmem>>, vector<1x1x8x32xf32>
      %70 = vector.shape_cast %69 : vector<1x1x8x32xf32> to vector<8x32xf32>
      %71 = vector.shape_cast %68 : vector<8x32xf32> to vector<1x1x8x32xf32>
      tpu.vector_store %arg8[%c0_58, %c0_59, %c0_60, %c96], %71 {strides = array<i32>} : memref<1x1x8x128xf32, #tpu.memory_space<vmem>>, vector<1x1x8x32xf32>,
    } else {
    }
    return
  }
  func.func @transform_0(%arg0: i32, %arg1: i32, %arg2: i32, %arg3: i32) -> (i32, i32, i32, i32) {
    %c0_i32 = arith.constant 0 : i32
    %c0_i32_0 = arith.constant 0 : i32
    return %arg0, %arg1, %arg2, %c0_i32 : i32, i32, i32, i32
  }
  func.func @transform_1(%arg0: i32, %arg1: i32, %arg2: i32, %arg3: i32) -> (i32, i32, i32, i32) {
    %c0_i32 = arith.constant 0 : i32
    %c0_i32_0 = arith.constant 0 : i32
    return %arg0, %arg1, %arg3, %c0_i32 : i32, i32, i32, i32
  }
  func.func @transform_2(%arg0: i32, %arg1: i32, %arg2: i32, %arg3: i32) -> (i32, i32, i32, i32) {
    %c0_i32 = arith.constant 0 : i32
    %c0_i32_0 = arith.constant 0 : i32
    return %arg0, %arg1, %arg3, %c0_i32 : i32, i32, i32, i32
  }
  func.func @transform_3(%arg0: i32, %arg1: i32, %arg2: i32, %arg3: i32) -> (i32, i32, i32, i32) {
    %c0_i32 = arith.constant 0 : i32
    return %arg0, %arg1, %arg2, %arg3 : i32, i32, i32, i32
  }
  func.func @transform_4(%arg0: i32, %arg1: i32, %arg2: i32, %arg3: i32) -> (i32, i32, i32, i32) {
    %c0_i32 = arith.constant 0 : i32
    %c0_i32_0 = arith.constant 0 : i32
    return %arg0, %arg1, %arg2, %c0_i32 : i32, i32, i32, i32
  }
}

</mosaic_0001>

<llo_original>
// kernel: tpu_custom_call.1
$region0: #{tpu_custom_call.1}
  #allocation0 [shape = 'u32[]', space=smem, size = 0x4, offset = 0x4, fixed_abs, tag = 'smem constant byte address 0x4 - core index']
  #allocation1 [shape = 'u32[144,128]{1,0:T(1,128)}', space=vmem, size = 0x12000, scoped, tag = 'internal scratch']
  #allocation2 [shape = 'f32[4,8,1]{2,1,0:T(8,128)}', space=vmem, size = 0x4000, scoped, tag = 'scratch operand']
  #allocation3 [shape = 'f32[4,8,1]{2,1,0:T(8,128)}', space=vmem, size = 0x4000, scoped, tag = 'scratch operand']
  #allocation4 [shape = 'f32[4,8,32]{2,1,0:T(8,128)}', space=vmem, size = 0x4000, scoped, tag = 'scratch operand']
  %s0 = inlined_call_operand.hbm [shape: f32[2,4,8,32], index: 0, kind: input, shape index: {}]
  %s1 = inlined_call_operand.hbm [shape: f32[2,4,8,32], index: 1, kind: input, shape index: {}]
  %s2 = inlined_call_operand.hbm [shape: f32[2,4,8,32], index: 2, kind: input, shape index: {}]
  %s3 = inlined_call_operand.hbm [shape: s8[2,4,8,8], index: 3, kind: input, shape index: {}]
  %s4 = inlined_call_operand.hbm [shape: f32[2,1,8,128], index: 4, kind: output, shape index: {}]
  %s5 = sld [smem:[#allocation0]]
  $region73: #{tpu_custom_call.1} parent=0
    _
  %s7 = ssub.s32 1, %s5
  %s8 = scalar_select 0, %s7, %s5
  $region1: #{tpu_custom_call.1} parent=0
    #allocation5 [shape = 'u8[32768]{0}', space=vmem, size = 0x8000, scoped, tag = 'input window, operand 0']
    #allocation6 [shape = 's32[2]{0}', space=sflag, size = 0x8, scoped, tag = 'scoped memory for tpu_custom_call.1']
    #allocation7 [shape = 's32[2]{0}', space=sflag, size = 0x8, scoped, tag = 'scoped memory for tpu_custom_call.1']
    #allocation8 [shape = 'u8[32768]{0}', space=vmem, size = 0x8000, scoped, tag = 'input window, operand 1']
    #allocation9 [shape = 's32[2]{0}', space=sflag, size = 0x8, scoped, tag = 'scoped memory for tpu_custom_call.1']
    #allocation10 [shape = 'u8[32768]{0}', space=vmem, size = 0x8000, scoped, tag = 'input window, operand 2']
    #allocation11 [shape = 'u8[8192]{0}', space=vmem, size = 0x2000, scoped, tag = 'input window, operand 3']
    #allocation12 [shape = 's32[2]{0}', space=sflag, size = 0x8, scoped, tag = 'scoped memory for tpu_custom_call.1']
    #allocation13 [shape = 'u8[8192]{0}', space=vmem, size = 0x2000, scoped, tag = 'output window, operand 0']
    %9 = vsyncpa [#allocation6], 0
    %s10 = scalar_lea.sflag [#allocation6], 1
    %11 = vsyncpa %s10, 0
    %12 = vsyncpa [#allocation9], 0
    %s13 = scalar_lea.sflag [#allocation9], 1
    %14 = vsyncpa %s13, 0
    %15 = vsyncpa [#allocation12], 0
    %s16 = scalar_lea.sflag [#allocation12], 1
    %17 = vsyncpa %s16, 0
    %18 = vsyncpa [#allocation7], 0
    %s19 = scalar_lea.sflag [#allocation7], 1
    %20 = vsyncpa %s19, 0
    loop: start=0, step=1, limit=4
    $region2: #{tpu_custom_call.1} parent=1 // loop_pre_header
      _
    $region3: #{tpu_custom_call.1} parent=1 // loop_header
      %s22 = sphi 0, %s26
      %p23 = scmp.ge.s32.totalorder %s22, 4
      %s29 = sphi 0, %s55
      %s30 = sphi 0, %s51
      %s31 = sphi 0, %s47
      %s32 = sphi 0, %s43
      %s33 = sphi 0, %s29
      %s34 = sphi 0, %s30
      %s35 = sphi 0, %s31
      %s36 = sphi 0, %s32
      %s37 = sphi 0, %s33
      %s38 = sphi 0, %s34
      %s39 = sphi 0, %s35
      %s40 = sphi 0, %s36
      %s62 = sphi 0, %s64
      %s65 = sphi 0, %s62
      %s66 = sphi 0, %s65
      %s82 = sphi 0, %s66
      %s92 = sphi 0, %s94
      %s95 = sphi 0, %s92
      %s96 = sphi 0, %s95
      %s112 = sphi 0, %s96
      %s122 = sphi 0, %s124
      %s125 = sphi 0, %s122
      %s126 = sphi 0, %s125
      %s142 = sphi 0, %s126
      %s154 = sphi 0, %s156
      %s157 = sphi 0, %s154
      %s158 = sphi 0, %s157
      %s174 = sphi 0, %s158
      %s184 = sphi 0, %s186
      %s187 = sphi 0, %s184
      %s188 = sphi 0, %s187
      %s204 = sphi 0, %s188
    $region4: #{tpu_custom_call.1} parent=1 // loop_header_branch
      %25 = sbr.rel (%p23) target = $region8
    $region5: #{tpu_custom_call.1} parent=1 // loop_body
      %s27 = ssub.s32 %s22, 1
      %s28 = ssub.s32 %s22, 2
      %s41 = sadd.s32 1, %s32
      %p42 = scmp.ge.s32.totalorder %s41, 1
      %s43 = scalar_select %p42, 0, %s41
      %s44 = sadd.s32 1, %s31
      %s45 = scalar_select %p42, %s44, %s31
      %p46 = scmp.ge.s32.totalorder %s45, 1
      %s47 = scalar_select %p46, 0, %s45
      %s48 = sadd.s32 1, %s30
      %s49 = scalar_select %p46, %s48, %s30
      %p50 = scmp.ge.s32.totalorder %s49, 1
      %s51 = scalar_select %p50, 0, %s49
      %s52 = sadd.s32 1, %s29
      %s53 = scalar_select %p50, %s52, %s29
      %p54 = scmp.ge.s32.totalorder %s53, 2
      %s55 = scalar_select %p54, 0, %s53
      %s56 = ssub.s32 %s29, %s55
      %s57 = ssub.s32 %s30, %s51
      %s58 = sor.u32 %s56, %s57
      %s59 = ssub.s32 %s31, %s47
      %s60 = sor.u32 %s58, %s59
      %p61 = scmp.eq.s32.totalorder %s60, 0
      %s63 = sadd.s32 %s62, 1
      %s64 = scalar_select %p61, %s62, %s63
      %p67 = pneg %p61
      %p68 = scmp.eq.s32.totalorder %s22, 1
      %p69 = por %p67, %p68
      %p70 = scmp.ne.s32.totalorder %s62, %s65
      %p71 = scmp.eq.s32.totalorder %s22, 0
      %p72 = por %p70, %p71
      %p73 = scmp.ne.s32.totalorder %s62, %s65
      %p74 = scmp.eq.s32.totalorder %s27, 1
      %p75 = por %p73, %p74
      %p76 = scmp.ne.s32.totalorder %s65, %s66
      %p77 = scmp.eq.s32.totalorder %s27, 0
      %p78 = por %p76, %p77
      %p79 = scmp.ne.s32.totalorder %s65, %s66
      %p80 = scmp.eq.s32.totalorder %s28, 1
      %p81 = por %p79, %p80
      %p83 = scmp.ne.s32.totalorder %s66, %s82
      %p84 = scmp.eq.s32.totalorder %s28, 0
      %p85 = por %p83, %p84
      %s86 = ssub.s32 %s29, %s55
      %s87 = ssub.s32 %s30, %s51
      %s88 = sor.u32 %s86, %s87
      %s89 = ssub.s32 %s32, %s43
      %s90 = sor.u32 %s88, %s89
      %p91 = scmp.eq.s32.totalorder %s90, 0
      %s93 = sadd.s32 %s92, 1
      %s94 = scalar_select %p91, %s92, %s93
      %p97 = pneg %p91
      %p98 = scmp.eq.s32.totalorder %s22, 1
      %p99 = por %p97, %p98
      %p100 = scmp.ne.s32.totalorder %s92, %s95
      %p101 = scmp.eq.s32.totalorder %s22, 0
      %p102 = por %p100, %p101
      %p103 = scmp.ne.s32.totalorder %s92, %s95
      %p104 = scmp.eq.s32.totalorder %s27, 1
      %p105 = por %p103, %p104
      %p106 = scmp.ne.s32.totalorder %s95, %s96
      %p107 = scmp.eq.s32.totalorder %s27, 0
      %p108 = por %p106, %p107
      %p109 = scmp.ne.s32.totalorder %s95, %s96
      %p110 = scmp.eq.s32.totalorder %s28, 1
      %p111 = por %p109, %p110
      %p113 = scmp.ne.s32.totalorder %s96, %s112
      %p114 = scmp.eq.s32.totalorder %s28, 0
      %p115 = por %p113, %p114
      %s116 = ssub.s32 %s29, %s55
      %s117 = ssub.s32 %s30, %s51
      %s118 = sor.u32 %s116, %s117
      %s119 = ssub.s32 %s32, %s43
      %s120 = sor.u32 %s118, %s119
      %p121 = scmp.eq.s32.totalorder %s120, 0
      %s123 = sadd.s32 %s122, 1
      %s124 = scalar_select %p121, %s122, %s123
      %p127 = pneg %p121
      %p128 = scmp.eq.s32.totalorder %s22, 1
      %p129 = por %p127, %p128
      %p130 = scmp.ne.s32.totalorder %s122, %s125
      %p131 = scmp.eq.s32.totalorder %s22, 0
      %p132 = por %p130, %p131
      %p133 = scmp.ne.s32.totalorder %s122, %s125
      %p134 = scmp.eq.s32.totalorder %s27, 1
      %p135 = por %p133, %p134
      %p136 = scmp.ne.s32.totalorder %s125, %s126
      %p137 = scmp.eq.s32.totalorder %s27, 0
      %p138 = por %p136, %p137
      %p139 = scmp.ne.s32.totalorder %s125, %s126
      %p140 = scmp.eq.s32.totalorder %s28, 1
      %p141 = por %p139, %p140
      %p143 = scmp.ne.s32.totalorder %s126, %s142
      %p144 = scmp.eq.s32.totalorder %s28, 0
      %p145 = por %p143, %p144
      %s146 = ssub.s32 %s29, %s55
      %s147 = ssub.s32 %s30, %s51
      %s148 = sor.u32 %s146, %s147
      %s149 = ssub.s32 %s31, %s47
      %s150 = sor.u32 %s148, %s149
      %s151 = ssub.s32 %s32, %s43
      %s152 = sor.u32 %s150, %s151
      %p153 = scmp.eq.s32.totalorder %s152, 0
      %s155 = sadd.s32 %s154, 1
      %s156 = scalar_select %p153, %s154, %s155
      %p159 = pneg %p153
      %p160 = scmp.eq.s32.totalorder %s22, 1
      %p161 = por %p159, %p160
      %p162 = scmp.ne.s32.totalorder %s154, %s157
      %p163 = scmp.eq.s32.totalorder %s22, 0
      %p164 = por %p162, %p163
      %p165 = scmp.ne.s32.totalorder %s154, %s157
      %p166 = scmp.eq.s32.totalorder %s27, 1
      %p167 = por %p165, %p166
      %p168 = scmp.ne.s32.totalorder %s157, %s158
      %p169 = scmp.eq.s32.totalorder %s27, 0
      %p170 = por %p168, %p169
      %p171 = scmp.ne.s32.totalorder %s157, %s158
      %p172 = scmp.eq.s32.totalorder %s28, 1
      %p173 = por %p171, %p172
      %p175 = scmp.ne.s32.totalorder %s158, %s174
      %p176 = scmp.eq.s32.totalorder %s28, 0
      %p177 = por %p175, %p176
      %s178 = ssub.s32 %s29, %s55
      %s179 = ssub.s32 %s30, %s51
      %s180 = sor.u32 %s178, %s179
      %s181 = ssub.s32 %s31, %s47
      %s182 = sor.u32 %s180, %s181
      %p183 = scmp.eq.s32.totalorder %s182, 0
      %s185 = sadd.s32 %s184, 1
      %s186 = scalar_select %p183, %s184, %s185
      %p189 = pneg %p183
      %p190 = scmp.eq.s32.totalorder %s22, 1
      %p191 = por %p189, %p190
      %p192 = scmp.ne.s32.totalorder %s184, %s187
      %p193 = scmp.eq.s32.totalorder %s22, 0
      %p194 = por %p192, %p193
      %p195 = scmp.ne.s32.totalorder %s184, %s187
      %p196 = scmp.eq.s32.totalorder %s27, 1
      %p197 = por %p195, %p196
      %p198 = scmp.ne.s32.totalorder %s187, %s188
      %p199 = scmp.eq.s32.totalorder %s27, 0
      %p200 = por %p198, %p199
      %p201 = scmp.ne.s32.totalorder %s187, %s188
      %p202 = scmp.eq.s32.totalorder %s28, 1
      %p203 = por %p201, %p202
      %p205 = scmp.ne.s32.totalorder %s188, %s204
      %p206 = scmp.eq.s32.totalorder %s28, 0
      %p207 = por %p205, %p206
      %p208 = scmp.le.s32.totalorder 1, %s22
      %p209 = scmp.lt.s32.totalorder %s22, 3
      %p210 = pnand %p208, %p209
      %p211 = pneg %p210
      // Predicated region
      $region9: #{tpu_custom_call.1} parent=5 // pred_check
        _
      $region10: #{tpu_custom_call.1} parent=5 // pred_check_branch
        %213 = sbr.rel (%p210) target = $region12
      $region11: #{tpu_custom_call.1} parent=5 // pred_region
        %s214 = ssub.s32 %s22, 1
      $region12: #{tpu_custom_call.1} parent=5 // pred_fallthru
        _
      %p215 = scmp.lt.s32.totalorder %s22, 2
      // Predicated region
      $region13: #{tpu_custom_call.1} parent=5 // pred_check
        %p216 = pneg %p215
      $region14: #{tpu_custom_call.1} parent=5 // pred_check_branch
        %218 = sbr.rel (%p216) target = $region16
      $region15: #{tpu_custom_call.1} parent=5 // pred_region
        // Predicated region
        $region17: #{tpu_custom_call.1} parent=15 // pred_check
          %p219 = pneg %p72
        $region18: #{tpu_custom_call.1} parent=15 // pred_check_branch
          %221 = sbr.rel (%p219) target = $region20
        $region19: #{tpu_custom_call.1} parent=15 // pred_region
          %s222 = sand.u32 %s62, 1
          %s223 = scalar_lea.sflag [#allocation6], %s222
          %s224 = sand.u32 %s62, 1
          %s225 = smul.addr %s224, 32
          %s226 = scalar_lea.vmem [#allocation5], %s225
          %s227 = smul.u32 4, %s30
          %s229 = ssub.s32 512, 512
          %230 = vsyncadd %s223, %s229
          %s231 = sadd.s32 %s31, %s227
          %s232 = smul.addr %s29, 4
          %s233 = sadd.s32 %s231, %s232
          %s234 = smul.addr %s233, 128
          %s235 = scalar_lea.hbm %s0, %s234
          %s236 = sshll.u32 %s226, 4
          %s237 = int_to_ptr.vmem [resolvable:$true] %s236
          %242 = dma.hbm_to_vmem [thread:$0]  %s235, 512, %s237, %s223, 128, 128, 8
        $region20: #{tpu_custom_call.1} parent=15 // pred_fallthru
          _
        // Predicated region
        $region21: #{tpu_custom_call.1} parent=15 // pred_check
          %p243 = pneg %p102
        $region22: #{tpu_custom_call.1} parent=15 // pred_check_branch
          %245 = sbr.rel (%p243) target = $region24
        $region23: #{tpu_custom_call.1} parent=15 // pred_region
          %s246 = sand.u32 %s22, 1
          %s247 = scalar_lea.sflag [#allocation9], %s246
          %s248 = sand.u32 %s92, 1
          %s249 = smul.addr %s248, 32
          %s250 = scalar_lea.vmem [#allocation8], %s249
          %s251 = smul.u32 4, %s30
          %s253 = ssub.s32 512, 512
          %254 = vsyncadd %s247, %s253
          %s255 = sadd.s32 %s32, %s251
          %s256 = smul.addr %s29, 4
          %s257 = sadd.s32 %s255, %s256
          %s258 = smul.addr %s257, 128
          %s259 = scalar_lea.hbm %s1, %s258
          %s260 = sshll.u32 %s250, 4
          %s261 = int_to_ptr.vmem [resolvable:$true] %s260
          %266 = dma.hbm_to_vmem [thread:$0]  %s259, 512, %s261, %s247, 128, 128, 8
        $region24: #{tpu_custom_call.1} parent=15 // pred_fallthru
          _
        // Predicated region
        $region25: #{tpu_custom_call.1} parent=15 // pred_check
          %p267 = pneg %p132
        $region26: #{tpu_custom_call.1} parent=15 // pred_check_branch
          %269 = sbr.rel (%p267) target = $region28
        $region27: #{tpu_custom_call.1} parent=15 // pred_region
          %s270 = sand.u32 %s22, 1
          %s271 = scalar_lea.sflag [#allocation9], %s270
          %s272 = sand.u32 %s122, 1
          %s273 = smul.addr %s272, 32
          %s274 = scalar_lea.vmem [#allocation10], %s273
          %s275 = smul.u32 4, %s30
          %s277 = ssub.s32 512, 512
          %278 = vsyncadd %s271, %s277
          %s279 = sadd.s32 %s32, %s275
          %s280 = smul.addr %s29, 4
          %s281 = sadd.s32 %s279, %s280
          %s282 = smul.addr %s281, 128
          %s283 = scalar_lea.hbm %s2, %s282
          %s284 = sshll.u32 %s274, 4
          %s285 = int_to_ptr.vmem [resolvable:$true] %s284
          %290 = dma.hbm_to_vmem [thread:$0]  %s283, 512, %s285, %s271, 128, 128, 8
        $region28: #{tpu_custom_call.1} parent=15 // pred_fallthru
          _
        // Predicated region
        $region29: #{tpu_custom_call.1} parent=15 // pred_check
          %p291 = pneg %p164
        $region30: #{tpu_custom_call.1} parent=15 // pred_check_branch
          %293 = sbr.rel (%p291) target = $region32
        $region31: #{tpu_custom_call.1} parent=15 // pred_region
          %s294 = sand.u32 %s154, 1
          %s295 = scalar_lea.sflag [#allocation12], %s294
          %s296 = sand.u32 %s154, 1
          %s297 = smul.addr %s296, 8
          %s298 = scalar_lea.vmem [#allocation11], %s297
          %s299 = smul.u32 4, %s30
          %s301 = ssub.s32 128, 128
          %302 = vsyncadd %s295, %s301
          %s303 = sadd.s32 %s32, %s31
          %s304 = sadd.s32 %s303, %s299
          %s305 = smul.addr %s29, 4
          %s306 = sadd.s32 %s304, %s305
          %s307 = smul.addr %s306, 32
          %s308 = scalar_lea.hbm %s3, %s307
          %s309 = sshll.u32 %s298, 4
          %s310 = int_to_ptr.vmem [resolvable:$true] %s309
          %315 = dma.hbm_to_vmem [thread:$0]  %s308, 128, %s310, %s295, 32, 32, 2
        $region32: #{tpu_custom_call.1} parent=15 // pred_fallthru
          _
      $region16: #{tpu_custom_call.1} parent=5 // pred_fallthru
        _
      %p316 = scmp.le.s32.totalorder 1, %s22
      %p317 = scmp.lt.s32.totalorder %s22, 3
      %p318 = pnand %p316, %p317
      %p319 = pneg %p318
      // Predicated region
      $region33: #{tpu_custom_call.1} parent=5 // pred_check
        _
      $region34: #{tpu_custom_call.1} parent=5 // pred_check_branch
        %321 = sbr.rel (%p318) target = $region36
      $region35: #{tpu_custom_call.1} parent=5 // pred_region
        %s322 = ssub.s32 %s22, 1
        %s323 = sand.u32 %s65, 1
        %s324 = scalar_lea.sflag [#allocation6], %s323
        %s325 = sand.u32 %s65, 1
        %s326 = smul.addr %s325, 32
        %s327 = scalar_lea.vmem [#allocation5], %s326
        // Predicated region
        $region37: #{tpu_custom_call.1} parent=35 // pred_check
          %p328 = pneg %p78
        $region38: #{tpu_custom_call.1} parent=35 // pred_check_branch
          %330 = sbr.rel (%p328) target = $region40
        $region39: #{tpu_custom_call.1} parent=35 // pred_region
          %331 = dma.done %s324, 512
        $region40: #{tpu_custom_call.1} parent=35 // pred_fallthru
          _
        %s332 = sand.u32 %s27, 1
        %s333 = scalar_lea.sflag [#allocation9], %s332
        %s334 = sand.u32 %s95, 1
        %s335 = smul.addr %s334, 32
        %s336 = scalar_lea.vmem [#allocation8], %s335
        // Predicated region
        $region41: #{tpu_custom_call.1} parent=35 // pred_check
          %p337 = pneg %p108
        $region42: #{tpu_custom_call.1} parent=35 // pred_check_branch
          %339 = sbr.rel (%p337) target = $region44
        $region43: #{tpu_custom_call.1} parent=35 // pred_region
          %340 = dma.done %s333, 512
        $region44: #{tpu_custom_call.1} parent=35 // pred_fallthru
          _
        %s341 = sand.u32 %s27, 1
        %s342 = scalar_lea.sflag [#allocation9], %s341
        %s343 = sand.u32 %s125, 1
        %s344 = smul.addr %s343, 32
        %s345 = scalar_lea.vmem [#allocation10], %s344
        // Predicated region
        $region45: #{tpu_custom_call.1} parent=35 // pred_check
          %p346 = pneg %p138
        $region46: #{tpu_custom_call.1} parent=35 // pred_check_branch
          %348 = sbr.rel (%p346) target = $region48
        $region47: #{tpu_custom_call.1} parent=35 // pred_region
          %349 = dma.done %s342, 512
        $region48: #{tpu_custom_call.1} parent=35 // pred_fallthru
          _
        %s350 = sand.u32 %s157, 1
        %s351 = scalar_lea.sflag [#allocation12], %s350
        %s352 = sand.u32 %s157, 1
        %s353 = smul.addr %s352, 8
        %s354 = scalar_lea.vmem [#allocation11], %s353
        // Predicated region
        $region49: #{tpu_custom_call.1} parent=35 // pred_check
          %p355 = pneg %p170
        $region50: #{tpu_custom_call.1} parent=35 // pred_check_branch
          %357 = sbr.rel (%p355) target = $region52
        $region51: #{tpu_custom_call.1} parent=35 // pred_region
          %358 = dma.done %s351, 128
        $region52: #{tpu_custom_call.1} parent=35 // pred_fallthru
          _
        %s359 = sand.u32 %s65, 1
        %s360 = scalar_lea.sflag [#allocation6], %s359
        %s361 = sand.u32 %s65, 1
        %s362 = smul.addr %s361, 32
        %s363 = scalar_lea.vmem [#allocation5], %s362
        %p364 = pneg %p78
        %p365 = pneg %p75
        %s366 = sand.u32 %s27, 1
        %s367 = scalar_lea.sflag [#allocation9], %s366
        %s368 = sand.u32 %s95, 1
        %s369 = smul.addr %s368, 32
        %s370 = scalar_lea.vmem [#allocation8], %s369
        %p371 = pneg %p108
        %p372 = pneg %p105
        %s373 = sand.u32 %s27, 1
        %s374 = scalar_lea.sflag [#allocation9], %s373
        %s375 = sand.u32 %s125, 1
        %s376 = smul.addr %s375, 32
        %s377 = scalar_lea.vmem [#allocation10], %s376
        %p378 = pneg %p138
        %p379 = pneg %p135
        %s380 = sand.u32 %s157, 1
        %s381 = scalar_lea.sflag [#allocation12], %s380
        %s382 = sand.u32 %s157, 1
        %s383 = smul.addr %s382, 8
        %s384 = scalar_lea.vmem [#allocation11], %s383
        %p385 = pneg %p170
        %p386 = pneg %p167
        %p387 = pneg %p200
        %p388 = pneg %p197
        %s389 = sand.u32 %s187, 1
        %s390 = scalar_lea.sflag [#allocation7], %s389
        %s391 = sand.u32 %s187, 1
        %s392 = smul.addr %s391, 8
        %s393 = scalar_lea.vmem [#allocation13], %s392
        %s394 = smul.u32 4, %s34
        %s395 = smul.u32 4, %s34
        %s396 = smul.u32 4, %s34
        %s397 = smul.u32 4, %s34
        %p400 = scmp.eq.s32.totalorder %s36, 0
        // Predicated region
        $region53: #{tpu_custom_call.1} parent=35 // pred_check
          %p401 = pneg %p400
        $region54: #{tpu_custom_call.1} parent=35 // pred_check_branch
          %403 = sbr.rel (%p401) target = $region56
        $region55: #{tpu_custom_call.1} parent=35 // pred_region
          %vm404 = vcmask 7168
          %405 = vst.msk [vmem:[#allocation2] sm:$0xff] %vm404, -inf
          %406 = vst.msk [vmem:[#allocation2 + $0x8] sm:$0xff] %vm404, -inf
          %407 = vst.msk [vmem:[#allocation2 + $0x10] sm:$0xff] %vm404, -inf
          %408 = vst.msk [vmem:[#allocation2 + $0x18] sm:$0xff] %vm404, -inf
          %409 = vst.msk [vmem:[#allocation3] sm:$0xff] %vm404, 0.0
          %410 = vst.msk [vmem:[#allocation3 + $0x8] sm:$0xff] %vm404, 0.0
          %411 = vst.msk [vmem:[#allocation3 + $0x10] sm:$0xff] %vm404, 0.0
          %412 = vst.msk [vmem:[#allocation3 + $0x18] sm:$0xff] %vm404, 0.0
          %vm413 = vcmask 261120
          %414 = vst.msk [vmem:[#allocation4] sm:$0xff] %vm413, 0.0
          %415 = vst.msk [vmem:[#allocation4 + $0x8] sm:$0xff] %vm413, 0.0
          %416 = vst.msk [vmem:[#allocation4 + $0x10] sm:$0xff] %vm413, 0.0
          %417 = vst.msk [vmem:[#allocation4 + $0x18] sm:$0xff] %vm413, 0.0
        $region56: #{tpu_custom_call.1} parent=35 // pred_fallthru
          _
        %v418 = vld [vmem:[%s327] sm:$0xff]
        %v419 = vld [vmem:[%s327 + $0x8] sm:$0xff]
        %v420 = vld [vmem:[%s327 + $0x10] sm:$0xff]
        %v421 = vld [vmem:[%s327 + $0x18] sm:$0xff]
        %v422 = vmul.f32 %v418, 0.17677669
        %v423 = vmul.f32 %v419, 0.17677669
        %v424 = vmul.f32 %v420, 0.17677669
        %v425 = vmul.f32 %v421, 0.17677669
        %v426 = vld [vmem:[%s336] sm:$0xff]
        %v427 = vld [vmem:[%s336 + $0x8] sm:$0xff]
        %v428 = vld [vmem:[%s336 + $0x10] sm:$0xff]
        %v429 = vld [vmem:[%s336 + $0x18] sm:$0xff]
        %v430 = vld [vmem:[%s345] sm:$0xff]
        %v431 = vld [vmem:[%s345 + $0x8] sm:$0xff]
        %v432 = vld [vmem:[%s345 + $0x10] sm:$0xff]
        %v433 = vld [vmem:[%s345 + $0x18] sm:$0xff]
        %vm434 = vcmask 261120
        %v436 = vsel %vm434, %v422, 0
        %v439 = vsel %vm434, %v426, 0
        %441 = vmatprep.subr.mxu0 0.0
        %442 = vmatpush1.xpose.msra.mxu0 %v439
        %443 = vmatprep.subr.mxu0 0.0
        %444 = vmatpush1.xpose.msra.mxu0 0.0
        %445 = vmatprep.subr.mxu0 0.0
        %446 = vmatpush1.xpose.msra.mxu0 0.0
        %447 = vmatprep.subr.mxu0 0.0
        %448 = vmatpush1.xpose.msra.mxu0 0.0
        %449 = vmatprep.subr.mxu0 0.0
        %450 = vmatpush1.xpose.msra.mxu0 0.0
        %451 = vmatprep.subr.mxu0 0.0
        %452 = vmatpush1.xpose.msra.mxu0 0.0
        %453 = vmatprep.subr.mxu0 0.0
        %454 = vmatpush1.xpose.msra.mxu0 0.0
        %455 = vmatprep.subr.mxu0 0.0
        %456 = vmatpush1.xpose.msra.mxu0 0.0
        %457 = vmatprep.subr.mxu0 0.0
        %458 = vmatpush1.xpose.msra.mxu0 0.0
        %459 = vmatprep.subr.mxu0 0.0
        %460 = vmatpush1.xpose.msra.mxu0 0.0
        %461 = vmatprep.subr.mxu0 0.0
        %462 = vmatpush1.xpose.msra.mxu0 0.0
        %463 = vmatprep.subr.mxu0 0.0
        %464 = vmatpush1.xpose.msra.mxu0 0.0
        %465 = vmatprep.subr.mxu0 0.0
        %466 = vmatpush1.xpose.msra.mxu0 0.0
        %467 = vmatprep.subr.mxu0 0.0
        %468 = vmatpush1.xpose.msra.mxu0 0.0
        %469 = vmatprep.subr.mxu0 0.0
        %470 = vmatpush1.xpose.msra.mxu0 0.0
        %471 = vmatprep.subr.mxu0 0.0
        %472 = vmatpush1.xpose.msra.mxu0 0.0
        %473 = vmatprep.subr.mxu0 0.0
        %474 = vmatpush1.xpose.msra.mxu0 0.0
        %475 = vmatprep.subr.mxu0 0.0
        %476 = vmatpush1.xpose.msra.mxu0 0.0
        %477 = vmatprep.subr.mxu0 0.0
        %478 = vmatpush1.xpose.msra.mxu0 0.0
        %479 = vmatprep.subr.mxu0 0.0
        %480 = vmatpush1.xpose.msra.mxu0 0.0
        %481 = vmatprep.subr.mxu0 0.0
        %482 = vmatpush1.xpose.msra.mxu0 0.0
        %483 = vmatprep.subr.mxu0 0.0
        %484 = vmatpush1.xpose.msra.mxu0 0.0
        %485 = vmatprep.subr.mxu0 0.0
        %486 = vmatpush1.xpose.msra.mxu0 0.0
        %487 = vmatprep.subr.mxu0 0.0
        %488 = vmatpush1.xpose.msra.mxu0 0.0
        %489 = vmatprep.subr.mxu0 0.0
        %490 = vmatpush1.xpose.msra.mxu0 0.0
        %491 = vmatprep.subr.mxu0 0.0
        %492 = vmatpush1.xpose.msra.mxu0 0.0
        %493 = vmatprep.subr.mxu0 0.0
        %494 = vmatpush1.xpose.msra.mxu0 0.0
        %495 = vmatprep.subr.mxu0 0.0
        %496 = vmatpush1.xpose.msra.mxu0 0.0
        %497 = vmatprep.subr.mxu0 0.0
        %498 = vmatpush1.xpose.msra.mxu0 0.0
        %499 = vmatprep.subr.mxu0 0.0
        %500 = vmatpush1.xpose.msra.mxu0 0.0
        %501 = vmatprep.subr.mxu0 0.0
        %502 = vmatpush1.xpose.msra.mxu0 0.0
        %503 = vmatprep.subr.mxu0 0.0
        %504 = vmatpush1.xpose.msra.mxu0 0.0
        %505 = vmatprep.mubr.f32.mxu0 0.0
        %506 = vmatmul.mubr.f32.gmra.mrb[0].mxu0 %v436
        %v507 = vpop.f32.mrb[0].mxu0
        %v508 = vadd.f32 0.0, %v507
        %v509 = vpop.f32.mrb[0].mxu0
        %510 = vdwg.mxu0
        %v512 = vsel %vm434, %v423, 0
        %v515 = vsel %vm434, %v427, 0
        %517 = vmatprep.subr.mxu0 0.0
        %518 = vmatpush1.xpose.msra.mxu0 %v515
        %519 = vmatprep.subr.mxu0 0.0
        %520 = vmatpush1.xpose.msra.mxu0 0.0
        %521 = vmatprep.subr.mxu0 0.0
        %522 = vmatpush1.xpose.msra.mxu0 0.0
        %523 = vmatprep.subr.mxu0 0.0
        %524 = vmatpush1.xpose.msra.mxu0 0.0
        %525 = vmatprep.subr.mxu0 0.0
        %526 = vmatpush1.xpose.msra.mxu0 0.0
        %527 = vmatprep.subr.mxu0 0.0
        %528 = vmatpush1.xpose.msra.mxu0 0.0
        %529 = vmatprep.subr.mxu0 0.0
        %530 = vmatpush1.xpose.msra.mxu0 0.0
        %531 = vmatprep.subr.mxu0 0.0
        %532 = vmatpush1.xpose.msra.mxu0 0.0
        %533 = vmatprep.subr.mxu0 0.0
        %534 = vmatpush1.xpose.msra.mxu0 0.0
        %535 = vmatprep.subr.mxu0 0.0
        %536 = vmatpush1.xpose.msra.mxu0 0.0
        %537 = vmatprep.subr.mxu0 0.0
        %538 = vmatpush1.xpose.msra.mxu0 0.0
        %539 = vmatprep.subr.mxu0 0.0
        %540 = vmatpush1.xpose.msra.mxu0 0.0
        %541 = vmatprep.subr.mxu0 0.0
        %542 = vmatpush1.xpose.msra.mxu0 0.0
        %543 = vmatprep.subr.mxu0 0.0
        %544 = vmatpush1.xpose.msra.mxu0 0.0
        %545 = vmatprep.subr.mxu0 0.0
        %546 = vmatpush1.xpose.msra.mxu0 0.0
        %547 = vmatprep.subr.mxu0 0.0
        %548 = vmatpush1.xpose.msra.mxu0 0.0
        %549 = vmatprep.subr.mxu0 0.0
        %550 = vmatpush1.xpose.msra.mxu0 0.0
        %551 = vmatprep.subr.mxu0 0.0
        %552 = vmatpush1.xpose.msra.mxu0 0.0
        %553 = vmatprep.subr.mxu0 0.0
        %554 = vmatpush1.xpose.msra.mxu0 0.0
        %555 = vmatprep.subr.mxu0 0.0
        %556 = vmatpush1.xpose.msra.mxu0 0.0
        %557 = vmatprep.subr.mxu0 0.0
        %558 = vmatpush1.xpose.msra.mxu0 0.0
        %559 = vmatprep.subr.mxu0 0.0
        %560 = vmatpush1.xpose.msra.mxu0 0.0
        %561 = vmatprep.subr.mxu0 0.0
        %562 = vmatpush1.xpose.msra.mxu0 0.0
        %563 = vmatprep.subr.mxu0 0.0
        %564 = vmatpush1.xpose.msra.mxu0 0.0
        %565 = vmatprep.subr.mxu0 0.0
        %566 = vmatpush1.xpose.msra.mxu0 0.0
        %567 = vmatprep.subr.mxu0 0.0
        %568 = vmatpush1.xpose.msra.mxu0 0.0
        %569 = vmatprep.subr.mxu0 0.0
        %570 = vmatpush1.xpose.msra.mxu0 0.0
        %571 = vmatprep.subr.mxu0 0.0
        %572 = vmatpush1.xpose.msra.mxu0 0.0
        %573 = vmatprep.subr.mxu0 0.0
        %574 = vmatpush1.xpose.msra.mxu0 0.0
        %575 = vmatprep.subr.mxu0 0.0
        %576 = vmatpush1.xpose.msra.mxu0 0.0
        %577 = vmatprep.subr.mxu0 0.0
        %578 = vmatpush1.xpose.msra.mxu0 0.0
        %579 = vmatprep.subr.mxu0 0.0
        %580 = vmatpush1.xpose.msra.mxu0 0.0
        %581 = vmatprep.mubr.f32.mxu0 0.0
        %582 = vmatmul.mubr.f32.gmra.mrb[0].mxu0 %v512
        %v583 = vpop.f32.mrb[0].mxu0
        %v584 = vadd.f32 0.0, %v583
        %v585 = vpop.f32.mrb[0].mxu0
        %586 = vdwg.mxu0
        %v588 = vsel %vm434, %v424, 0
        %v591 = vsel %vm434, %v428, 0
        %593 = vmatprep.subr.mxu0 0.0
        %594 = vmatpush1.xpose.msra.mxu0 %v591
        %595 = vmatprep.subr.mxu0 0.0
        %596 = vmatpush1.xpose.msra.mxu0 0.0
        %597 = vmatprep.subr.mxu0 0.0
        %598 = vmatpush1.xpose.msra.mxu0 0.0
        %599 = vmatprep.subr.mxu0 0.0
        %600 = vmatpush1.xpose.msra.mxu0 0.0
        %601 = vmatprep.subr.mxu0 0.0
        %602 = vmatpush1.xpose.msra.mxu0 0.0
        %603 = vmatprep.subr.mxu0 0.0
        %604 = vmatpush1.xpose.msra.mxu0 0.0
        %605 = vmatprep.subr.mxu0 0.0
        %606 = vmatpush1.xpose.msra.mxu0 0.0
        %607 = vmatprep.subr.mxu0 0.0
        %608 = vmatpush1.xpose.msra.mxu0 0.0
        %609 = vmatprep.subr.mxu0 0.0
        %610 = vmatpush1.xpose.msra.mxu0 0.0
        %611 = vmatprep.subr.mxu0 0.0
        %612 = vmatpush1.xpose.msra.mxu0 0.0
        %613 = vmatprep.subr.mxu0 0.0
        %614 = vmatpush1.xpose.msra.mxu0 0.0
        %615 = vmatprep.subr.mxu0 0.0
        %616 = vmatpush1.xpose.msra.mxu0 0.0
        %617 = vmatprep.subr.mxu0 0.0
        %618 = vmatpush1.xpose.msra.mxu0 0.0
        %619 = vmatprep.subr.mxu0 0.0
        %620 = vmatpush1.xpose.msra.mxu0 0.0
        %621 = vmatprep.subr.mxu0 0.0
        %622 = vmatpush1.xpose.msra.mxu0 0.0
        %623 = vmatprep.subr.mxu0 0.0
        %624 = vmatpush1.xpose.msra.mxu0 0.0
        %625 = vmatprep.subr.mxu0 0.0
        %626 = vmatpush1.xpose.msra.mxu0 0.0
        %627 = vmatprep.subr.mxu0 0.0
        %628 = vmatpush1.xpose.msra.mxu0 0.0
        %629 = vmatprep.subr.mxu0 0.0
        %630 = vmatpush1.xpose.msra.mxu0 0.0
        %631 = vmatprep.subr.mxu0 0.0
        %632 = vmatpush1.xpose.msra.mxu0 0.0
        %633 = vmatprep.subr.mxu0 0.0
        %634 = vmatpush1.xpose.msra.mxu0 0.0
        %635 = vmatprep.subr.mxu0 0.0
        %636 = vmatpush1.xpose.msra.mxu0 0.0
        %637 = vmatprep.subr.mxu0 0.0
        %638 = vmatpush1.xpose.msra.mxu0 0.0
        %639 = vmatprep.subr.mxu0 0.0
        %640 = vmatpush1.xpose.msra.mxu0 0.0
        %641 = vmatprep.subr.mxu0 0.0
        %642 = vmatpush1.xpose.msra.mxu0 0.0
        %643 = vmatprep.subr.mxu0 0.0
        %644 = vmatpush1.xpose.msra.mxu0 0.0
        %645 = vmatprep.subr.mxu0 0.0
        %646 = vmatpush1.xpose.msra.mxu0 0.0
        %647 = vmatprep.subr.mxu0 0.0
        %648 = vmatpush1.xpose.msra.mxu0 0.0
        %649 = vmatprep.subr.mxu0 0.0
        %650 = vmatpush1.xpose.msra.mxu0 0.0
        %651 = vmatprep.subr.mxu0 0.0
        %652 = vmatpush1.xpose.msra.mxu0 0.0
        %653 = vmatprep.subr.mxu0 0.0
        %654 = vmatpush1.xpose.msra.mxu0 0.0
        %655 = vmatprep.subr.mxu0 0.0
        %656 = vmatpush1.xpose.msra.mxu0 0.0
        %657 = vmatprep.mubr.f32.mxu0 0.0
        %658 = vmatmul.mubr.f32.gmra.mrb[0].mxu0 %v588
        %v659 = vpop.f32.mrb[0].mxu0
        %v660 = vadd.f32 0.0, %v659
        %v661 = vpop.f32.mrb[0].mxu0
        %662 = vdwg.mxu0
        %v664 = vsel %vm434, %v425, 0
        %v667 = vsel %vm434, %v429, 0
        %669 = vmatprep.subr.mxu0 0.0
        %670 = vmatpush1.xpose.msra.mxu0 %v667
        %671 = vmatprep.subr.mxu0 0.0
        %672 = vmatpush1.xpose.msra.mxu0 0.0
        %673 = vmatprep.subr.mxu0 0.0
        %674 = vmatpush1.xpose.msra.mxu0 0.0
        %675 = vmatprep.subr.mxu0 0.0
        %676 = vmatpush1.xpose.msra.mxu0 0.0
        %677 = vmatprep.subr.mxu0 0.0
        %678 = vmatpush1.xpose.msra.mxu0 0.0
        %679 = vmatprep.subr.mxu0 0.0
        %680 = vmatpush1.xpose.msra.mxu0 0.0
        %681 = vmatprep.subr.mxu0 0.0
        %682 = vmatpush1.xpose.msra.mxu0 0.0
        %683 = vmatprep.subr.mxu0 0.0
        %684 = vmatpush1.xpose.msra.mxu0 0.0
        %685 = vmatprep.subr.mxu0 0.0
        %686 = vmatpush1.xpose.msra.mxu0 0.0
        %687 = vmatprep.subr.mxu0 0.0
        %688 = vmatpush1.xpose.msra.mxu0 0.0
        %689 = vmatprep.subr.mxu0 0.0
        %690 = vmatpush1.xpose.msra.mxu0 0.0
        %691 = vmatprep.subr.mxu0 0.0
        %692 = vmatpush1.xpose.msra.mxu0 0.0
        %693 = vmatprep.subr.mxu0 0.0
        %694 = vmatpush1.xpose.msra.mxu0 0.0
        %695 = vmatprep.subr.mxu0 0.0
        %696 = vmatpush1.xpose.msra.mxu0 0.0
        %697 = vmatprep.subr.mxu0 0.0
        %698 = vmatpush1.xpose.msra.mxu0 0.0
        %699 = vmatprep.subr.mxu0 0.0
        %700 = vmatpush1.xpose.msra.mxu0 0.0
        %701 = vmatprep.subr.mxu0 0.0
        %702 = vmatpush1.xpose.msra.mxu0 0.0
        %703 = vmatprep.subr.mxu0 0.0
        %704 = vmatpush1.xpose.msra.mxu0 0.0
        %705 = vmatprep.subr.mxu0 0.0
        %706 = vmatpush1.xpose.msra.mxu0 0.0
        %707 = vmatprep.subr.mxu0 0.0
        %708 = vmatpush1.xpose.msra.mxu0 0.0
        %709 = vmatprep.subr.mxu0 0.0
        %710 = vmatpush1.xpose.msra.mxu0 0.0
        %711 = vmatprep.subr.mxu0 0.0
        %712 = vmatpush1.xpose.msra.mxu0 0.0
        %713 = vmatprep.subr.mxu0 0.0
        %714 = vmatpush1.xpose.msra.mxu0 0.0
        %715 = vmatprep.subr.mxu0 0.0
        %716 = vmatpush1.xpose.msra.mxu0 0.0
        %717 = vmatprep.subr.mxu0 0.0
        %718 = vmatpush1.xpose.msra.mxu0 0.0
        %719 = vmatprep.subr.mxu0 0.0
        %720 = vmatpush1.xpose.msra.mxu0 0.0
        %721 = vmatprep.subr.mxu0 0.0
        %722 = vmatpush1.xpose.msra.mxu0 0.0
        %723 = vmatprep.subr.mxu0 0.0
        %724 = vmatpush1.xpose.msra.mxu0 0.0
        %725 = vmatprep.subr.mxu0 0.0
        %726 = vmatpush1.xpose.msra.mxu0 0.0
        %727 = vmatprep.subr.mxu0 0.0
        %728 = vmatpush1.xpose.msra.mxu0 0.0
        %729 = vmatprep.subr.mxu0 0.0
        %730 = vmatpush1.xpose.msra.mxu0 0.0
        %731 = vmatprep.subr.mxu0 0.0
        %732 = vmatpush1.xpose.msra.mxu0 0.0
        %733 = vmatprep.mubr.f32.mxu0 0.0
        %734 = vmatmul.mubr.f32.gmra.mrb[0].mxu0 %v664
        %v735 = vpop.f32.mrb[0].mxu0
        %v736 = vadd.f32 0.0, %v735
        %v737 = vpop.f32.mrb[0].mxu0
        %738 = vdwg.mxu0
        %v739 = vld [vmem:[%s354] sm:$0x3]
        %v740 = vld [vmem:[%s354 + $0x2] sm:$0x3]
        %v741 = vld [vmem:[%s354 + $0x4] sm:$0x3]
        %v742 = vld [vmem:[%s354 + $0x6] sm:$0x3]
        %vm743 = vnez %v739
        %vm744 = vnez %v740
        %vm745 = vnez %v741
        %vm746 = vnez %v742
        %v747 = vsel %vm743, 16843009, 0
        %v748 = vsel %vm744, 16843009, 0
        %v749 = vsel %vm745, 16843009, 0
        %v750 = vsel %vm746, 16843009, 0
        %v751 = vunpack.c.0.s8 %v747
        %v752 = vunpack.c.0.s8 %v748
        %v753 = vunpack.c.0.s8 %v749
        %v754 = vunpack.c.0.s8 %v750
        %vm755 = vcmp.ne.s32.totalorder %v751, 0
        %vm756 = vcmp.ne.s32.totalorder %v752, 0
        %vm757 = vcmp.ne.s32.totalorder %v753, 0
        %vm758 = vcmp.ne.s32.totalorder %v754, 0
        %v759 = vsel %vm755, %v508, -1e+30
        %v760 = vsel %vm756, %v584, -1e+30
        %v761 = vsel %vm757, %v660, -1e+30
        %v762 = vsel %vm758, %v736, -1e+30
        %v763 = vld [vmem:[#allocation2] sm:$0xff]
        %v764 = vld [vmem:[#allocation2 + $0x8] sm:$0xff]
        %v765 = vld [vmem:[#allocation2 + $0x10] sm:$0xff]
        %v766 = vld [vmem:[#allocation2 + $0x18] sm:$0xff]
        %vm767 = vcmask 64512
        %v768 = vsel %vm767, %v759, -inf
        %769 = vmax.xlane.f32.xlu0 %v768
        %v770 = vpop.xlane.xlu0 %769
        %v771 = vsel %vm767, %v760, -inf
        %772 = vmax.xlane.f32.xlu0 %v771
        %v773 = vpop.xlane.xlu0 %772
        %v774 = vsel %vm767, %v761, -inf
        %775 = vmax.xlane.f32.xlu0 %v774
        %v776 = vpop.xlane.xlu0 %775
        %v777 = vsel %vm767, %v762, -inf
        %778 = vmax.xlane.f32.xlu0 %v777
        %v779 = vpop.xlane.xlu0 %778
        %v780 = vmax.f32 %v763, %v770
        %v781 = vmax.f32 %v764, %v773
        %v782 = vmax.f32 %v765, %v776
        %v783 = vmax.f32 %v766, %v779
        %v784 = vsub.f32 %v763, %v780
        %v785 = vsub.f32 %v764, %v781
        %v786 = vsub.f32 %v765, %v782
        %v787 = vsub.f32 %v766, %v783
        %v788 = vmul.f32 %v784, 1.442695
        %v789 = vpow.pop %v788
        %v790 = vmul.f32 %v785, 1.442695
        %v791 = vpow.pop %v790
        %v792 = vmul.f32 %v786, 1.442695
        %v793 = vpow.pop %v792
        %v794 = vmul.f32 %v787, 1.442695
        %v795 = vpow.pop %v794
        %797 = vset.pattern.permute.xlu0 0
        %798 = vperm.xlu0 %797, %v780
        %v799 = vpop.permute.xlu0 %798
        %802 = vset.pattern.permute.xlu0 0
        %803 = vperm.xlu0 %802, %v781
        %v804 = vpop.permute.xlu0 %803
        %807 = vset.pattern.permute.xlu0 0
        %808 = vperm.xlu0 %807, %v782
        %v809 = vpop.permute.xlu0 %808
        %812 = vset.pattern.permute.xlu0 0
        %813 = vperm.xlu0 %812, %v783
        %v814 = vpop.permute.xlu0 %813
        %v816 = vsub.f32 %v759, %v799
        %v817 = vsub.f32 %v760, %v804
        %v818 = vsub.f32 %v761, %v809
        %v819 = vsub.f32 %v762, %v814
        %v820 = vmul.f32 %v816, 1.442695
        %v821 = vpow.pop %v820
        %v822 = vmul.f32 %v817, 1.442695
        %v823 = vpow.pop %v822
        %v824 = vmul.f32 %v818, 1.442695
        %v825 = vpow.pop %v824
        %v826 = vmul.f32 %v819, 1.442695
        %v827 = vpow.pop %v826
        %v828 = vld [vmem:[#allocation3] sm:$0xff]
        %v829 = vld [vmem:[#allocation3 + $0x8] sm:$0xff]
        %v830 = vld [vmem:[#allocation3 + $0x10] sm:$0xff]
        %v831 = vld [vmem:[#allocation3 + $0x18] sm:$0xff]
        %v832 = vmul.f32 %v789, %v828
        %v833 = vmul.f32 %v791, %v829
        %v834 = vmul.f32 %v793, %v830
        %v835 = vmul.f32 %v795, %v831
        %v836 = vsel %vm767, %v821, 0.0
        %837 = vadd.xlane.f32.xlu0 %v836
        %v838 = vpop.xlane.xlu0 %837
        %v839 = vsel %vm767, %v823, 0.0
        %840 = vadd.xlane.f32.xlu0 %v839
        %v841 = vpop.xlane.xlu0 %840
        %v842 = vsel %vm767, %v825, 0.0
        %843 = vadd.xlane.f32.xlu0 %v842
        %v844 = vpop.xlane.xlu0 %843
        %v845 = vsel %vm767, %v827, 0.0
        %846 = vadd.xlane.f32.xlu0 %v845
        %v847 = vpop.xlane.xlu0 %846
        %v848 = vadd.f32 %v832, %v838
        %v849 = vadd.f32 %v833, %v841
        %v850 = vadd.f32 %v834, %v844
        %v851 = vadd.f32 %v835, %v847
        %vm852 = vcmask 7168
        %853 = vst.msk [vmem:[#allocation3] sm:$0xff] %vm852, %v848
        %854 = vst.msk [vmem:[#allocation3 + $0x8] sm:$0xff] %vm852, %v849
        %855 = vst.msk [vmem:[#allocation3 + $0x10] sm:$0xff] %vm852, %v850
        %856 = vst.msk [vmem:[#allocation3 + $0x18] sm:$0xff] %vm852, %v851
        %v858 = vsel %vm767, %v821, 0
        %860 = vmatprep.subr.mxu0 0.0
        %861 = vmatpush1.msra.mxu0 %v430
        %862 = vmatprep.subr.mxu0 0.0
        %863 = vmatpush1.msra.mxu0 0.0
        %864 = vmatprep.subr.mxu0 0.0
        %865 = vmatpush1.msra.mxu0 0.0
        %866 = vmatprep.subr.mxu0 0.0
        %867 = vmatpush1.msra.mxu0 0.0
        %868 = vmatprep.subr.mxu0 0.0
        %869 = vmatpush1.msra.mxu0 0.0
        %870 = vmatprep.subr.mxu0 0.0
        %871 = vmatpush1.msra.mxu0 0.0
        %872 = vmatprep.subr.mxu0 0.0
        %873 = vmatpush1.msra.mxu0 0.0
        %874 = vmatprep.subr.mxu0 0.0
        %875 = vmatpush1.msra.mxu0 0.0
        %876 = vmatprep.subr.mxu0 0.0
        %877 = vmatpush1.msra.mxu0 0.0
        %878 = vmatprep.subr.mxu0 0.0
        %879 = vmatpush1.msra.mxu0 0.0
        %880 = vmatprep.subr.mxu0 0.0
        %881 = vmatpush1.msra.mxu0 0.0
        %882 = vmatprep.subr.mxu0 0.0
        %883 = vmatpush1.msra.mxu0 0.0
        %884 = vmatprep.subr.mxu0 0.0
        %885 = vmatpush1.msra.mxu0 0.0
        %886 = vmatprep.subr.mxu0 0.0
        %887 = vmatpush1.msra.mxu0 0.0
        %888 = vmatprep.subr.mxu0 0.0
        %889 = vmatpush1.msra.mxu0 0.0
        %890 = vmatprep.subr.mxu0 0.0
        %891 = vmatpush1.msra.mxu0 0.0
        %892 = vmatprep.subr.mxu0 0.0
        %893 = vmatpush1.msra.mxu0 0.0
        %894 = vmatprep.subr.mxu0 0.0
        %895 = vmatpush1.msra.mxu0 0.0
        %896 = vmatprep.subr.mxu0 0.0
        %897 = vmatpush1.msra.mxu0 0.0
        %898 = vmatprep.subr.mxu0 0.0
        %899 = vmatpush1.msra.mxu0 0.0
        %900 = vmatprep.subr.mxu0 0.0
        %901 = vmatpush1.msra.mxu0 0.0
        %902 = vmatprep.subr.mxu0 0.0
        %903 = vmatpush1.msra.mxu0 0.0
        %904 = vmatprep.subr.mxu0 0.0
        %905 = vmatpush1.msra.mxu0 0.0
        %906 = vmatprep.subr.mxu0 0.0
        %907 = vmatpush1.msra.mxu0 0.0
        %908 = vmatprep.subr.mxu0 0.0
        %909 = vmatpush1.msra.mxu0 0.0
        %910 = vmatprep.subr.mxu0 0.0
        %911 = vmatpush1.msra.mxu0 0.0
        %912 = vmatprep.subr.mxu0 0.0
        %913 = vmatpush1.msra.mxu0 0.0
        %914 = vmatprep.subr.mxu0 0.0
        %915 = vmatpush1.msra.mxu0 0.0
        %916 = vmatprep.subr.mxu0 0.0
        %917 = vmatpush1.msra.mxu0 0.0
        %918 = vmatprep.subr.mxu0 0.0
        %919 = vmatpush1.msra.mxu0 0.0
        %920 = vmatprep.subr.mxu0 0.0
        %921 = vmatpush1.msra.mxu0 0.0
        %922 = vmatprep.subr.mxu0 0.0
        %923 = vmatpush1.msra.mxu0 0.0
        %924 = vmatprep.mubr.f32.mxu0 0.0
        %925 = vmatmul.mubr.f32.gmra.mrb[0].mxu0 %v858
        %v926 = vpop.f32.mrb[0].mxu0
        %v927 = vadd.f32 0.0, %v926
        %v928 = vpop.f32.mrb[0].mxu0
        %929 = vdwg.mxu0
        %v931 = vsel %vm767, %v823, 0
        %933 = vmatprep.subr.mxu0 0.0
        %934 = vmatpush1.msra.mxu0 %v431
        %935 = vmatprep.subr.mxu0 0.0
        %936 = vmatpush1.msra.mxu0 0.0
        %937 = vmatprep.subr.mxu0 0.0
        %938 = vmatpush1.msra.mxu0 0.0
        %939 = vmatprep.subr.mxu0 0.0
        %940 = vmatpush1.msra.mxu0 0.0
        %941 = vmatprep.subr.mxu0 0.0
        %942 = vmatpush1.msra.mxu0 0.0
        %943 = vmatprep.subr.mxu0 0.0
        %944 = vmatpush1.msra.mxu0 0.0
        %945 = vmatprep.subr.mxu0 0.0
        %946 = vmatpush1.msra.mxu0 0.0
        %947 = vmatprep.subr.mxu0 0.0
        %948 = vmatpush1.msra.mxu0 0.0
        %949 = vmatprep.subr.mxu0 0.0
        %950 = vmatpush1.msra.mxu0 0.0
        %951 = vmatprep.subr.mxu0 0.0
        %952 = vmatpush1.msra.mxu0 0.0
        %953 = vmatprep.subr.mxu0 0.0
        %954 = vmatpush1.msra.mxu0 0.0
        %955 = vmatprep.subr.mxu0 0.0
        %956 = vmatpush1.msra.mxu0 0.0
        %957 = vmatprep.subr.mxu0 0.0
        %958 = vmatpush1.msra.mxu0 0.0
        %959 = vmatprep.subr.mxu0 0.0
        %960 = vmatpush1.msra.mxu0 0.0
        %961 = vmatprep.subr.mxu0 0.0
        %962 = vmatpush1.msra.mxu0 0.0
        %963 = vmatprep.subr.mxu0 0.0
        %964 = vmatpush1.msra.mxu0 0.0
        %965 = vmatprep.subr.mxu0 0.0
        %966 = vmatpush1.msra.mxu0 0.0
        %967 = vmatprep.subr.mxu0 0.0
        %968 = vmatpush1.msra.mxu0 0.0
        %969 = vmatprep.subr.mxu0 0.0
        %970 = vmatpush1.msra.mxu0 0.0
        %971 = vmatprep.subr.mxu0 0.0
        %972 = vmatpush1.msra.mxu0 0.0
        %973 = vmatprep.subr.mxu0 0.0
        %974 = vmatpush1.msra.mxu0 0.0
        %975 = vmatprep.subr.mxu0 0.0
        %976 = vmatpush1.msra.mxu0 0.0
        %977 = vmatprep.subr.mxu0 0.0
        %978 = vmatpush1.msra.mxu0 0.0
        %979 = vmatprep.subr.mxu0 0.0
        %980 = vmatpush1.msra.mxu0 0.0
        %981 = vmatprep.subr.mxu0 0.0
        %982 = vmatpush1.msra.mxu0 0.0
        %983 = vmatprep.subr.mxu0 0.0
        %984 = vmatpush1.msra.mxu0 0.0
        %985 = vmatprep.subr.mxu0 0.0
        %986 = vmatpush1.msra.mxu0 0.0
        %987 = vmatprep.subr.mxu0 0.0
        %988 = vmatpush1.msra.mxu0 0.0
        %989 = vmatprep.subr.mxu0 0.0
        %990 = vmatpush1.msra.mxu0 0.0
        %991 = vmatprep.subr.mxu0 0.0
        %992 = vmatpush1.msra.mxu0 0.0
        %993 = vmatprep.subr.mxu0 0.0
        %994 = vmatpush1.msra.mxu0 0.0
        %995 = vmatprep.subr.mxu0 0.0
        %996 = vmatpush1.msra.mxu0 0.0
        %997 = vmatprep.mubr.f32.mxu0 0.0
        %998 = vmatmul.mubr.f32.gmra.mrb[0].mxu0 %v931
        %v999 = vpop.f32.mrb[0].mxu0
        %v1000 = vadd.f32 0.0, %v999
        %v1001 = vpop.f32.mrb[0].mxu0
        %1002 = vdwg.mxu0
        %v1004 = vsel %vm767, %v825, 0
        %1006 = vmatprep.subr.mxu0 0.0
        %1007 = vmatpush1.msra.mxu0 %v432
        %1008 = vmatprep.subr.mxu0 0.0
        %1009 = vmatpush1.msra.mxu0 0.0
        %1010 = vmatprep.subr.mxu0 0.0
        %1011 = vmatpush1.msra.mxu0 0.0
        %1012 = vmatprep.subr.mxu0 0.0
        %1013 = vmatpush1.msra.mxu0 0.0
        %1014 = vmatprep.subr.mxu0 0.0
        %1015 = vmatpush1.msra.mxu0 0.0
        %1016 = vmatprep.subr.mxu0 0.0
        %1017 = vmatpush1.msra.mxu0 0.0
        %1018 = vmatprep.subr.mxu0 0.0
        %1019 = vmatpush1.msra.mxu0 0.0
        %1020 = vmatprep.subr.mxu0 0.0
        %1021 = vmatpush1.msra.mxu0 0.0
        %1022 = vmatprep.subr.mxu0 0.0
        %1023 = vmatpush1.msra.mxu0 0.0
        %1024 = vmatprep.subr.mxu0 0.0
        %1025 = vmatpush1.msra.mxu0 0.0
        %1026 = vmatprep.subr.mxu0 0.0
        %1027 = vmatpush1.msra.mxu0 0.0
        %1028 = vmatprep.subr.mxu0 0.0
        %1029 = vmatpush1.msra.mxu0 0.0
        %1030 = vmatprep.subr.mxu0 0.0
        %1031 = vmatpush1.msra.mxu0 0.0
        %1032 = vmatprep.subr.mxu0 0.0
        %1033 = vmatpush1.msra.mxu0 0.0
        %1034 = vmatprep.subr.mxu0 0.0
        %1035 = vmatpush1.msra.mxu0 0.0
        %1036 = vmatprep.subr.mxu0 0.0
        %1037 = vmatpush1.msra.mxu0 0.0
        %1038 = vmatprep.subr.mxu0 0.0
        %1039 = vmatpush1.msra.mxu0 0.0
        %1040 = vmatprep.subr.mxu0 0.0
        %1041 = vmatpush1.msra.mxu0 0.0
        %1042 = vmatprep.subr.mxu0 0.0
        %1043 = vmatpush1.msra.mxu0 0.0
        %1044 = vmatprep.subr.mxu0 0.0
        %1045 = vmatpush1.msra.mxu0 0.0
        %1046 = vmatprep.subr.mxu0 0.0
        %1047 = vmatpush1.msra.mxu0 0.0
        %1048 = vmatprep.subr.mxu0 0.0
        %1049 = vmatpush1.msra.mxu0 0.0
        %1050 = vmatprep.subr.mxu0 0.0
        %1051 = vmatpush1.msra.mxu0 0.0
        %1052 = vmatprep.subr.mxu0 0.0
        %1053 = vmatpush1.msra.mxu0 0.0
        %1054 = vmatprep.subr.mxu0 0.0
        %1055 = vmatpush1.msra.mxu0 0.0
        %1056 = vmatprep.subr.mxu0 0.0
        %1057 = vmatpush1.msra.mxu0 0.0
        %1058 = vmatprep.subr.mxu0 0.0
        %1059 = vmatpush1.msra.mxu0 0.0
        %1060 = vmatprep.subr.mxu0 0.0
        %1061 = vmatpush1.msra.mxu0 0.0
        %1062 = vmatprep.subr.mxu0 0.0
        %1063 = vmatpush1.msra.mxu0 0.0
        %1064 = vmatprep.subr.mxu0 0.0
        %1065 = vmatpush1.msra.mxu0 0.0
        %1066 = vmatprep.subr.mxu0 0.0
        %1067 = vmatpush1.msra.mxu0 0.0
        %1068 = vmatprep.subr.mxu0 0.0
        %1069 = vmatpush1.msra.mxu0 0.0
        %1070 = vmatprep.mubr.f32.mxu0 0.0
        %1071 = vmatmul.mubr.f32.gmra.mrb[0].mxu0 %v1004
        %v1072 = vpop.f32.mrb[0].mxu0
        %v1073 = vadd.f32 0.0, %v1072
        %v1074 = vpop.f32.mrb[0].mxu0
        %1075 = vdwg.mxu0
        %v1077 = vsel %vm767, %v827, 0
        %1079 = vmatprep.subr.mxu0 0.0
        %1080 = vmatpush1.msra.mxu0 %v433
        %1081 = vmatprep.subr.mxu0 0.0
        %1082 = vmatpush1.msra.mxu0 0.0
        %1083 = vmatprep.subr.mxu0 0.0
        %1084 = vmatpush1.msra.mxu0 0.0
        %1085 = vmatprep.subr.mxu0 0.0
        %1086 = vmatpush1.msra.mxu0 0.0
        %1087 = vmatprep.subr.mxu0 0.0
        %1088 = vmatpush1.msra.mxu0 0.0
        %1089 = vmatprep.subr.mxu0 0.0
        %1090 = vmatpush1.msra.mxu0 0.0
        %1091 = vmatprep.subr.mxu0 0.0
        %1092 = vmatpush1.msra.mxu0 0.0
        %1093 = vmatprep.subr.mxu0 0.0
        %1094 = vmatpush1.msra.mxu0 0.0
        %1095 = vmatprep.subr.mxu0 0.0
        %1096 = vmatpush1.msra.mxu0 0.0
        %1097 = vmatprep.subr.mxu0 0.0
        %1098 = vmatpush1.msra.mxu0 0.0
        %1099 = vmatprep.subr.mxu0 0.0
        %1100 = vmatpush1.msra.mxu0 0.0
        %1101 = vmatprep.subr.mxu0 0.0
        %1102 = vmatpush1.msra.mxu0 0.0
        %1103 = vmatprep.subr.mxu0 0.0
        %1104 = vmatpush1.msra.mxu0 0.0
        %1105 = vmatprep.subr.mxu0 0.0
        %1106 = vmatpush1.msra.mxu0 0.0
        %1107 = vmatprep.subr.mxu0 0.0
        %1108 = vmatpush1.msra.mxu0 0.0
        %1109 = vmatprep.subr.mxu0 0.0
        %1110 = vmatpush1.msra.mxu0 0.0
        %1111 = vmatprep.subr.mxu0 0.0
        %1112 = vmatpush1.msra.mxu0 0.0
        %1113 = vmatprep.subr.mxu0 0.0
        %1114 = vmatpush1.msra.mxu0 0.0
        %1115 = vmatprep.subr.mxu0 0.0
        %1116 = vmatpush1.msra.mxu0 0.0
        %1117 = vmatprep.subr.mxu0 0.0
        %1118 = vmatpush1.msra.mxu0 0.0
        %1119 = vmatprep.subr.mxu0 0.0
        %1120 = vmatpush1.msra.mxu0 0.0
        %1121 = vmatprep.subr.mxu0 0.0
        %1122 = vmatpush1.msra.mxu0 0.0
        %1123 = vmatprep.subr.mxu0 0.0
        %1124 = vmatpush1.msra.mxu0 0.0
        %1125 = vmatprep.subr.mxu0 0.0
        %1126 = vmatpush1.msra.mxu0 0.0
        %1127 = vmatprep.subr.mxu0 0.0
        %1128 = vmatpush1.msra.mxu0 0.0
        %1129 = vmatprep.subr.mxu0 0.0
        %1130 = vmatpush1.msra.mxu0 0.0
        %1131 = vmatprep.subr.mxu0 0.0
        %1132 = vmatpush1.msra.mxu0 0.0
        %1133 = vmatprep.subr.mxu0 0.0
        %1134 = vmatpush1.msra.mxu0 0.0
        %1135 = vmatprep.subr.mxu0 0.0
        %1136 = vmatpush1.msra.mxu0 0.0
        %1137 = vmatprep.subr.mxu0 0.0
        %1138 = vmatpush1.msra.mxu0 0.0
        %1139 = vmatprep.subr.mxu0 0.0
        %1140 = vmatpush1.msra.mxu0 0.0
        %1141 = vmatprep.subr.mxu0 0.0
        %1142 = vmatpush1.msra.mxu0 0.0
        %1143 = vmatprep.mubr.f32.mxu0 0.0
        %1144 = vmatmul.mubr.f32.gmra.mrb[0].mxu0 %v1077
        %v1145 = vpop.f32.mrb[0].mxu0
        %v1146 = vadd.f32 0.0, %v1145
        %v1147 = vpop.f32.mrb[0].mxu0
        %1148 = vdwg.mxu0
        %v1149 = vld [vmem:[#allocation4] sm:$0xff]
        %v1150 = vld [vmem:[#allocation4 + $0x8] sm:$0xff]
        %v1151 = vld [vmem:[#allocation4 + $0x10] sm:$0xff]
        %v1152 = vld [vmem:[#allocation4 + $0x18] sm:$0xff]
        %1154 = vset.pattern.permute.xlu0 0
        %1155 = vperm.xlu0 %1154, %v789
        %v1156 = vpop.permute.xlu0 %1155
        %1159 = vset.pattern.permute.xlu0 0
        %1160 = vperm.xlu0 %1159, %v791
        %v1161 = vpop.permute.xlu0 %1160
        %1164 = vset.pattern.permute.xlu0 0
        %1165 = vperm.xlu0 %1164, %v793
        %v1166 = vpop.permute.xlu0 %1165
        %1169 = vset.pattern.permute.xlu0 0
        %1170 = vperm.xlu0 %1169, %v795
        %v1171 = vpop.permute.xlu0 %1170
        %v1173 = vmul.f32 %v1156, %v1149
        %v1174 = vmul.f32 %v1161, %v1150
        %v1175 = vmul.f32 %v1166, %v1151
        %v1176 = vmul.f32 %v1171, %v1152
        %v1177 = vadd.f32 %v1173, %v927
        %v1178 = vadd.f32 %v1174, %v1000
        %v1179 = vadd.f32 %v1175, %v1073
        %v1180 = vadd.f32 %v1176, %v1146
        %1181 = vst.msk [vmem:[#allocation4] sm:$0xff] %vm434, %v1177
        %1182 = vst.msk [vmem:[#allocation4 + $0x8] sm:$0xff] %vm434, %v1178
        %1183 = vst.msk [vmem:[#allocation4 + $0x10] sm:$0xff] %vm434, %v1179
        %1184 = vst.msk [vmem:[#allocation4 + $0x18] sm:$0xff] %vm434, %v1180
        %1185 = vst.msk [vmem:[#allocation2] sm:$0xff] %vm852, %v780
        %1186 = vst.msk [vmem:[#allocation2 + $0x8] sm:$0xff] %vm852, %v781
        %1187 = vst.msk [vmem:[#allocation2 + $0x10] sm:$0xff] %vm852, %v782
        %1188 = vst.msk [vmem:[#allocation2 + $0x18] sm:$0xff] %vm852, %v783
        // Predicated region
        $region57: #{tpu_custom_call.1} parent=35 // pred_check
          %p1189 = pneg %p400
        $region58: #{tpu_custom_call.1} parent=35 // pred_check_branch
          %1191 = sbr.rel (%p1189) target = $region60
        $region59: #{tpu_custom_call.1} parent=35 // pred_region
          %v1192 = vld [vmem:[#allocation3] sm:$0xff]
          %v1193 = vld [vmem:[#allocation3 + $0x8] sm:$0xff]
          %v1194 = vld [vmem:[#allocation3 + $0x10] sm:$0xff]
          %v1195 = vld [vmem:[#allocation3 + $0x18] sm:$0xff]
          %v1196 = vrcp.pop %v1192
          %v1197 = vrcp.pop %v1193
          %v1198 = vrcp.pop %v1194
          %v1199 = vrcp.pop %v1195
          %v1200 = vmul.f32 %v1192, %v1196
          %v1201 = vmul.f32 %v1193, %v1197
          %v1202 = vmul.f32 %v1194, %v1198
          %v1203 = vmul.f32 %v1195, %v1199
          %v1204 = vsub.f32 2.0, %v1200
          %v1205 = vsub.f32 2.0, %v1201
          %v1206 = vsub.f32 2.0, %v1202
          %v1207 = vsub.f32 2.0, %v1203
          %v1208 = vmul.f32 %v1196, %v1204
          %v1209 = vmul.f32 %v1197, %v1205
          %v1210 = vmul.f32 %v1198, %v1206
          %v1211 = vmul.f32 %v1199, %v1207
          %v1212 = vld [vmem:[#allocation4] sm:$0xff]
          %v1213 = vld [vmem:[#allocation4 + $0x8] sm:$0xff]
          %v1214 = vld [vmem:[#allocation4 + $0x10] sm:$0xff]
          %v1215 = vld [vmem:[#allocation4 + $0x18] sm:$0xff]
          %1217 = vset.pattern.permute.xlu0 0
          %1218 = vperm.xlu0 %1217, %v1208
          %v1219 = vpop.permute.xlu0 %1218
          %1222 = vset.pattern.permute.xlu0 0
          %1223 = vperm.xlu0 %1222, %v1209
          %v1224 = vpop.permute.xlu0 %1223
          %1227 = vset.pattern.permute.xlu0 0
          %1228 = vperm.xlu0 %1227, %v1210
          %v1229 = vpop.permute.xlu0 %1228
          %1232 = vset.pattern.permute.xlu0 0
          %1233 = vperm.xlu0 %1232, %v1211
          %v1234 = vpop.permute.xlu0 %1233
          %v1236 = vmul.f32 %v1212, %v1219
          %v1237 = vmul.f32 %v1213, %v1224
          %v1238 = vmul.f32 %v1214, %v1229
          %v1239 = vmul.f32 %v1215, %v1234
          %1240 = vst.msk [vmem:[%s393] sm:$0xff] %vm434, %v1236
          %1242 = vrot.lane.b32.xlu0 %v1237, 32
          %v1243 = vpop.permute.xlu0 %1242
          %vm1245 = vcmask 523520
          %1246 = vst.msk [vmem:[%s393] sm:$0xff] %vm1245, %v1243
          %1248 = vrot.lane.b32.xlu0 %v1238, 64
          %v1249 = vpop.permute.xlu0 %1248
          %vm1251 = vcmask 785920
          %1252 = vst.msk [vmem:[%s393] sm:$0xff] %vm1251, %v1249
          %1254 = vrot.lane.b32.xlu0 %v1239, 96
          %v1255 = vpop.permute.xlu0 %1254
          %vm1257 = vcmask 1048320
          %1258 = vst.msk [vmem:[%s393] sm:$0xff] %vm1257, %v1255
        $region60: #{tpu_custom_call.1} parent=35 // pred_fallthru
          _
        %s1259 = sand.u32 %s187, 1
        %s1260 = scalar_lea.sflag [#allocation7], %s1259
        %s1261 = sand.u32 %s187, 1
        %s1262 = smul.addr %s1261, 8
        %s1263 = scalar_lea.vmem [#allocation13], %s1262
        // Predicated region
        $region61: #{tpu_custom_call.1} parent=35 // pred_check
          %p1264 = pneg %p197
        $region62: #{tpu_custom_call.1} parent=35 // pred_check_branch
          %1266 = sbr.rel (%p1264) target = $region64
        $region63: #{tpu_custom_call.1} parent=35 // pred_region
          %s1268 = ssub.s32 128, 128
          %1269 = vsyncadd %s1260, %s1268
          %s1270 = sadd.s32 %s35, %s34
          %s1271 = sadd.s32 %s1270, %s33
          %s1272 = smul.addr %s1271, 128
          %s1273 = scalar_lea.hbm %s4, %s1272
          %s1275 = sshll.u32 %s1263, 4
          %s1276 = int_to_ptr.vmem [resolvable:$true] %s1275
          %1278 = dma.vmem_to_hbm [thread:$0]  %s1276, 128, %s1273, %s1260
        $region64: #{tpu_custom_call.1} parent=35 // pred_fallthru
          _
      $region36: #{tpu_custom_call.1} parent=5 // pred_fallthru
        _
      %p1279 = scmp.le.s32.totalorder 2, %s22
      // Predicated region
      $region65: #{tpu_custom_call.1} parent=5 // pred_check
        %p1280 = pneg %p1279
      $region66: #{tpu_custom_call.1} parent=5 // pred_check_branch
        %1282 = sbr.rel (%p1280) target = $region68
      $region67: #{tpu_custom_call.1} parent=5 // pred_region
        %s1283 = ssub.s32 %s22, 2
        // Predicated region
        $region69: #{tpu_custom_call.1} parent=67 // pred_check
          %p1284 = pneg %p203
        $region70: #{tpu_custom_call.1} parent=67 // pred_check_branch
          %1286 = sbr.rel (%p1284) target = $region72
        $region71: #{tpu_custom_call.1} parent=67 // pred_region
          %s1287 = sand.u32 %s188, 1
          %s1288 = scalar_lea.sflag [#allocation7], %s1287
          %s1289 = sand.u32 %s188, 1
          %s1290 = smul.addr %s1289, 8
          %s1291 = scalar_lea.vmem [#allocation13], %s1290
          %1292 = dma.done %s1288, 128
        $region72: #{tpu_custom_call.1} parent=67 // pred_fallthru
          _
      $region68: #{tpu_custom_call.1} parent=5 // pred_fallthru
        _
    $region6: #{tpu_custom_call.1} parent=1 // loop_footer
      %s26 = sadd.s32 1, %s22
    $region7: #{tpu_custom_call.1} parent=1 // loop_footer_branch
      %21 = sbr.rel target = $region3
    $region8: #{tpu_custom_call.1} parent=1 // loop_exit
      _
    %1293 = vsyncpa [#allocation6], 1
    %s1294 = scalar_lea.sflag [#allocation6], 1
    %1295 = vsyncpa %s1294, 1
    %1296 = vsyncpa [#allocation9], 1
    %s1297 = scalar_lea.sflag [#allocation9], 1
    %1298 = vsyncpa %s1297, 1
    %1299 = vsyncpa [#allocation12], 1
    %s1300 = scalar_lea.sflag [#allocation12], 1
    %1301 = vsyncpa %s1300, 1
    %1302 = vsyncpa [#allocation7], 1
    %s1303 = scalar_lea.sflag [#allocation7], 1
    %1304 = vsyncpa %s1303, 1

</llo_original>
